<compile_context>
chip_gen: v6e
topology: v6e:2x2x1
jax: 0.10.0
libtpu: 0.0.40
codegen_flags: <defaults>
</compile_context>

<pallas_src>
import jax
import jax.numpy as jnp
from jax import lax
from jax.experimental import pallas as pl
from jax.experimental.pallas import tpu as pltpu


D_MODEL = 128
D_COORD = 2
D_STATE = 2
D_TGT = 4
D_FF = 4 * D_MODEL        # transformer FFN hidden
D_HALF = D_MODEL // 2     # states_mlp hidden (padded to D_MODEL lanes)

# Column offsets inside the packed (D_MODEL, 1408) bf16 weight slab.
# All boundaries are multiples of 128 -> lane-tile aligned static slices.
_C_QKV0, _C_QKV1 = 0, 3 * D_MODEL                  # Wq | Wk | Wv@Wo
_C_FF10, _C_FF11 = _C_QKV1, _C_QKV1 + D_FF         # Wff1
_C_F1G0, _C_F1G1 = _C_FF11, _C_FF11 + D_MODEL      # Wf1 geom half
_C_WS0, _C_WS1 = _C_F1G1, _C_F1G1 + D_MODEL        # ws2 @ Wf1 state half (folded)
_C_F20, _C_F21 = _C_WS1, _C_WS1 + D_MODEL          # Wf2
_C_F30, _C_F31 = _C_F21, _C_F21 + D_MODEL          # Wf3 (zero-padded to 128 cols)
_W_BIG_COLS = _C_F31                               # 1408


def _gelu(x):
    # TODO(synk): nn.GELU() defaults to the exact erf formulation; the tanh
    # approximation is used because it lowers cleanly to the EUP on Mosaic.
    c = 0.7978845608028654  # sqrt(2/pi)
    return 0.5 * x * (1.0 + jnp.tanh(c * (x + 0.044715 * x * x * x)))


def _layernorm(x, g, b, eps=1e-5):
    mu = jnp.mean(x, axis=-1, keepdims=True)
    var = jnp.mean((x - mu) * (x - mu), axis=-1, keepdims=True)
    return (x - mu) * lax.rsqrt(var + eps) * g + b


# ---------------------------------------------------------------------------
# Single fused kernel: transformer encoder -> geom -> states_mlp -> fusion_mlp
# ---------------------------------------------------------------------------
def fused_kernel(length_ref,                 # SMEM (1,) int32
                 coords_ref,                 # (S, 2)   f32
                 states_ref,                 # (N, 2)   f32
                 w_big_ref,                  # (D, 1408) bf16 packed weight slab
                 w_ff2_ref,                  # (4D, D)   bf16
                 small_ref,                  # (16, D)   f32  packed 128-wide rows
                 bwide_ref,                  # (2, 4D)   f32  [bqkv(384) ; bff1]
                 out_ref):                   # (N, D)    f32  lane-dense output
    f32 = jnp.float32
    bf16 = jnp.bfloat16
    s = coords_ref.shape[0]
    length = length_ref[0]

    # packed 128-wide f32 rows (static slices, zero runtime cost)
    w_emb0 = small_ref[0:1, :]
    w_emb1 = small_ref[1:2, :]
    ws1_0 = small_ref[2:3, :]
    ws1_1 = small_ref[3:4, :]
    b_emb = small_ref[4:5, :]
    bo = small_ref[5:6, :]
    ln1g = small_ref[6:7, :]
    ln1b = small_ref[7:8, :]
    bff2 = small_ref[8:9, :]
    ln2g = small_ref[9:10, :]
    ln2b = small_ref[10:11, :]
    bs1 = small_ref[11:12, :]
    bf1 = small_ref[12:13, :]          # includes folded bs2 @ Wf1_state
    bf2 = small_ref[13:14, :]
    bf3 = small_ref[14:15, :]

    bqkv = bwide_ref[0:1, 0:3 * D_MODEL]
    bff1 = bwide_ref[1:2, :]

    # bf16 weight views (static, lane-aligned slices of the packed slab)
    wqkv = w_big_ref[:, _C_QKV0:_C_QKV1]
    wff1 = w_big_ref[:, _C_FF10:_C_FF11]
    wf1g = w_big_ref[:, _C_F1G0:_C_F1G1]
    w_s = w_big_ref[:, _C_WS0:_C_WS1]
    wf2 = w_big_ref[:, _C_F20:_C_F21]
    wf3 = w_big_ref[:, _C_F30:_C_F31]
    wff2 = w_ff2_ref[...]

    # ---- transformer encoder over coordinates -----------------------------
    # K=2 embedding as two VPU broadcast FMAs (keeps the MXU free).
    coords = coords_ref[...]
    x = (coords[:, 0:1] * w_emb0
         + coords[:, 1:2] * w_emb1
         + b_emb)                                                   # (S, D) f32

    qkv = jnp.dot(x.astype(bf16), wqkv, preferred_element_type=f32) + bqkv
    q = qkv[:, 0:D_MODEL]
    k = qkv[:, D_MODEL:2 * D_MODEL]
    v = qkv[:, 2 * D_MODEL:3 * D_MODEL]   # == (x@Wv + bv) @ Wo  (folded offline)

    scale = 1.0 / (D_MODEL ** 0.5)
    # q @ k^T: contract last dims, no materialized transpose.
    scores = lax.dot_general(q.astype(bf16), k.astype(bf16),
                             (((1,), (1,)), ((), ())),
                             preferred_element_type=f32) * scale    # (S, S)

    # key-side padding mask from `length`
    key_idx = lax.broadcasted_iota(jnp.int32, (1, s), 1)
    key_mask = key_idx < length                                     # (1, S)
    scores = jnp.where(key_mask, scores, -1e30)

    # softmax in f32 with an exact divide (rows sum to 1)
    m = jnp.max(scores, axis=-1, keepdims=True)
    p = jnp.exp(scores - m)
    attn = p / jnp.sum(p, axis=-1, keepdims=True)

    # Wv@Wo already folded into v, so this is the full attention output + bo.
    ctx = jnp.dot(attn.astype(bf16), v.astype(bf16),
                  preferred_element_type=f32) + bo

    x = _layernorm(x + ctx, ln1g, ln1b)

    h = jnp.dot(x.astype(bf16), wff1, preferred_element_type=f32) + bff1
    h = _gelu(h)
    h = jnp.dot(h.astype(bf16), wff2, preferred_element_type=f32) + bff2

    x = _layernorm(x + h, ln2g, ln2b)                               # (S, D)

    # masked mean pool over the first `length` positions as a (1,S)x(S,D)
    # matmul (MXU) instead of an axis-0 cross-sublane reduce (f32: activation
    # only, no HBM weight traffic to save).
    row_mask = key_mask.astype(f32)                                 # (1, S)
    pooled = jnp.dot(row_mask, x, preferred_element_type=f32)       # (1, D)
    inv_len = 1.0 / jnp.maximum(length, 1).astype(f32)              # length==0 guard
    geom = pooled * inv_len                                         # (1, D)

    # ---- states_mlp layer 1: Linear(2, D/2) -> GELU ------------------------
    # K=2 as broadcast FMAs; hidden padded D/2 -> D with zero weight/bias
    # columns (gelu(0)=0 and the folded W_s has zero pad rows => exact).
    st = states_ref[...]
    hs = _gelu(st[:, 0:1] * ws1_0 + st[:, 1:2] * ws1_1 + bs1)       # (N, D)

    # ---- fusion_mlp on cat([geom_expanded, state], dim=1) ------------------
    #   cat @ Wf1 == geom @ Wf1[:D] + state @ Wf1[D:]
    #   and (hs @ ws2 + bs2) @ Wf1[D:] == hs @ (ws2 @ Wf1[D:]) + bs2 @ Wf1[D:]
    #   (ws2/bs2 folded offline into w_s and bf1 -> one matmul removed).
    g_part = jnp.dot(geom.astype(bf16), wf1g, preferred_element_type=f32)  # (1, D)
    s_part = jnp.dot(hs.astype(bf16), w_s, preferred_element_type=f32)     # (N, D)
    f = _gelu(g_part + s_part + bf1)
    f = _gelu(jnp.dot(f.astype(bf16), wf2, preferred_element_type=f32) + bf2)
    # lane-dense store: wf3/bf3 are zero-padded to 128 columns.
    out_ref[...] = jnp.dot(f.astype(bf16), wf3, preferred_element_type=f32) + bf3


# ---------------------------------------------------------------------------
# Wrapper
# ---------------------------------------------------------------------------
@jax.jit
def transformer_mlp_forward(coordinates, length, states, params):
    w_big, w_ff2, small, bwide = params
    n = states.shape[0]
    out = pl.pallas_call(
        fused_kernel,
        out_shape=jax.ShapeDtypeStruct((n, D_MODEL), jnp.float32),
        in_specs=([pl.BlockSpec(memory_space=pltpu.MemorySpace.SMEM)]      # length
                  + [pl.BlockSpec(memory_space=pltpu.MemorySpace.VMEM)] * 6),
        out_specs=pl.BlockSpec(memory_space=pltpu.MemorySpace.VMEM),
    )(length, coordinates, states, w_big, w_ff2, small, bwide)
    return out[:, :D_TGT]


# ---------------------------------------------------------------------------
# Parameter construction (packed / folded layout expected by the kernel)
# ---------------------------------------------------------------------------
def init_params(key):
    f32 = jnp.float32

    def dense(k, shape, scale=0.05):
        return (scale * jax.random.normal(k, shape)).astype(f32)

    keys = jax.random.split(key, 16)
    it = iter(keys)

    # ---- "PyTorch-equivalent" raw weights ----------------------------------
    w_emb = dense(next(it), (D_COORD, D_MODEL)); b_emb = jnp.zeros((D_MODEL,), f32)
    wq = dense(next(it), (D_MODEL, D_MODEL)); bq = jnp.zeros((D_MODEL,), f32)
    wk = dense(next(it), (D_MODEL, D_MODEL)); bk = jnp.zeros((D_MODEL,), f32)
    wv = dense(next(it), (D_MODEL, D_MODEL)); bv = jnp.zeros((D_MODEL,), f32)
    wo = dense(next(it), (D_MODEL, D_MODEL)); bo = jnp.zeros((D_MODEL,), f32)
    ln1g = jnp.ones((D_MODEL,), f32); ln1b = jnp.zeros((D_MODEL,), f32)
    wff1 = dense(next(it), (D_MODEL, D_FF)); bff1 = jnp.zeros((D_FF,), f32)
    wff2 = dense(next(it), (D_FF, D_MODEL)); bff2 = jnp.zeros((D_MODEL,), f32)
    ln2g = jnp.ones((D_MODEL,), f32); ln2b = jnp.zeros((D_MODEL,), f32)

    ws1 = dense(next(it), (D_STATE, D_HALF)); bs1 = jnp.zeros((D_HALF,), f32)
    ws2 = dense(next(it), (D_HALF, D_MODEL)); bs2 = jnp.zeros((D_MODEL,), f32)

    wf1 = dense(next(it), (2 * D_MODEL, D_MODEL)); bf1 = jnp.zeros((D_MODEL,), f32)
    wf2 = dense(next(it), (D_MODEL, D_MODEL)); bf2 = jnp.zeros((D_MODEL,), f32)
    wf3 = dense(next(it), (D_MODEL, D_TGT)); bf3 = jnp.zeros((D_TGT,), f32)

    # ---- exact offline folds (done in f32) ----------------------------------
    # (1) Wv@Wo into the V slice of Wqkv; bv@Wo into its bias; bo stays separate.
    wqkv = jnp.concatenate([wq, wk, wv @ wo], axis=1)               # (D, 3D)
    bqkv = jnp.concatenate([bq, bk, bv @ wo], axis=0)               # (3D,)

    # (2) states_mlp layer 2 folded through fusion layer 1's state half.
    wf1_geom = wf1[:D_MODEL, :]
    wf1_state = wf1[D_MODEL:, :]
    ws2_p = jnp.zeros((D_MODEL, D_MODEL), f32).at[:D_HALF, :].set(ws2)
    w_s = ws2_p @ wf1_state                                         # (D, D)
    bf1_f = bf1 + bs2 @ wf1_state                                   # (D,)

    # zero-padded pieces (numerically identical to the unpadded math)
    ws1_p = jnp.zeros((D_STATE, D_MODEL), f32).at[:, :D_HALF].set(ws1)
    bs1_p = jnp.zeros((D_MODEL,), f32).at[:D_HALF].set(bs1)
    wf3_p = jnp.zeros((D_MODEL, D_MODEL), f32).at[:, :D_TGT].set(wf3)
    bf3_p = jnp.zeros((D_MODEL,), f32).at[:D_TGT].set(bf3)

    # ---- packed arrays handed to the kernel ---------------------------------
    # Big bf16 slab: every D_MODEL-contraction weight, lane-concatenated.
    w_big = jnp.concatenate(
        [wqkv, wff1, wf1_geom, w_s, wf2, wf3_p], axis=1).astype(jnp.bfloat16)
    assert w_big.shape == (D_MODEL, _W_BIG_COLS)
    w_ff2 = wff2.astype(jnp.bfloat16)                               # (4D, D)

    # Small f32 pack: embed rows, ws1 rows and all 128-wide vectors (16 rows).
    small = jnp.stack([w_emb[0], w_emb[1], ws1_p[0], ws1_p[1],
                       b_emb, bo, ln1g, ln1b, bff2, ln2g, ln2b,
                       bs1_p, bf1_f, bf2, bf3_p,
                       jnp.zeros((D_MODEL,), f32)], axis=0)         # (16, D)

    bqkv_p = jnp.zeros((D_FF,), f32).at[:3 * D_MODEL].set(bqkv)
    bwide = jnp.stack([bqkv_p, bff1], axis=0)                       # (2, 4D)

    return (w_big, w_ff2, small, bwide)


if __name__ == "__main__":
    key = jax.random.PRNGKey(0)
    k_coord, k_state, k_param = jax.random.split(key, 3)

    S = 16          # coordinate sequence length
    N = 8           # number of state rows

    coordinates = jax.random.normal(k_coord, (S, D_COORD), jnp.float32)
    length = jnp.array([12], dtype=jnp.int32)          # valid prefix length
    states = jax.random.normal(k_state, (N, D_STATE), jnp.float32)

    params = init_params(k_param)

    result = transformer_mlp_forward(coordinates, length, states, params)
    result = jax.block_until_ready(result)

    assert result.shape == (N, D_TGT)
    assert bool(jnp.all(jnp.isfinite(result)))
    print("KERNEL_OK")
</pallas_src>

<mosaic_0001>
module attributes {stable_mosaic.version = 11 : i64} {
  func.func @fused_kernel(%arg0: memref<1xi32, #tpu.memory_space<smem>>, %arg1: memref<16x2xf32, #tpu.memory_space<vmem>>, %arg2: memref<8x2xf32, #tpu.memory_space<vmem>>, %arg3: memref<128x1408xbf16, #tpu.memory_space<vmem>>, %arg4: memref<512x128xbf16, #tpu.memory_space<vmem>>, %arg5: memref<16x128xf32, #tpu.memory_space<vmem>>, %arg6: memref<2x512xf32, #tpu.memory_space<vmem>>, %arg7: memref<8x128xf32, #tpu.memory_space<vmem>>) attributes {dimension_semantics = [], scalar_prefetch = 0 : i64, scratch_operands = 0 : i64, tpu.core_type = #tpu.core_type<tc>} {
    %c0 = arith.constant 0 : index
    %0 = memref.load %arg0[%c0] : memref<1xi32, #tpu.memory_space<smem>>
    %c0_0 = arith.constant 0 : index
    %c0_1 = arith.constant 0 : index
    %1 = vector.load %arg5[%c0_0, %c0_1] : memref<16x128xf32, #tpu.memory_space<vmem>>, vector<1x128xf32>
    %c1 = arith.constant 1 : index
    %c0_2 = arith.constant 0 : index
    %2 = vector.load %arg5[%c1, %c0_2] : memref<16x128xf32, #tpu.memory_space<vmem>>, vector<1x128xf32>
    %c2 = arith.constant 2 : index
    %c0_3 = arith.constant 0 : index
    %3 = vector.load %arg5[%c2, %c0_3] : memref<16x128xf32, #tpu.memory_space<vmem>>, vector<1x128xf32>
    %c3 = arith.constant 3 : index
    %c0_4 = arith.constant 0 : index
    %4 = vector.load %arg5[%c3, %c0_4] : memref<16x128xf32, #tpu.memory_space<vmem>>, vector<1x128xf32>
    %c4 = arith.constant 4 : index
    %c0_5 = arith.constant 0 : index
    %5 = vector.load %arg5[%c4, %c0_5] : memref<16x128xf32, #tpu.memory_space<vmem>>, vector<1x128xf32>
    %c5 = arith.constant 5 : index
    %c0_6 = arith.constant 0 : index
    %6 = vector.load %arg5[%c5, %c0_6] : memref<16x128xf32, #tpu.memory_space<vmem>>, vector<1x128xf32>
    %c6 = arith.constant 6 : index
    %c0_7 = arith.constant 0 : index
    %7 = vector.load %arg5[%c6, %c0_7] : memref<16x128xf32, #tpu.memory_space<vmem>>, vector<1x128xf32>
    %c7 = arith.constant 7 : index
    %c0_8 = arith.constant 0 : index
    %8 = vector.load %arg5[%c7, %c0_8] : memref<16x128xf32, #tpu.memory_space<vmem>>, vector<1x128xf32>
    %c8 = arith.constant 8 : index
    %c0_9 = arith.constant 0 : index
    %9 = vector.load %arg5[%c8, %c0_9] : memref<16x128xf32, #tpu.memory_space<vmem>>, vector<1x128xf32>
    %c9 = arith.constant 9 : index
    %c0_10 = arith.constant 0 : index
    %10 = vector.load %arg5[%c9, %c0_10] : memref<16x128xf32, #tpu.memory_space<vmem>>, vector<1x128xf32>
    %c10 = arith.constant 10 : index
    %c0_11 = arith.constant 0 : index
    %11 = vector.load %arg5[%c10, %c0_11] : memref<16x128xf32, #tpu.memory_space<vmem>>, vector<1x128xf32>
    %c11 = arith.constant 11 : index
    %c0_12 = arith.constant 0 : index
    %12 = vector.load %arg5[%c11, %c0_12] : memref<16x128xf32, #tpu.memory_space<vmem>>, vector<1x128xf32>
    %c12 = arith.constant 12 : index
    %c0_13 = arith.constant 0 : index
    %13 = vector.load %arg5[%c12, %c0_13] : memref<16x128xf32, #tpu.memory_space<vmem>>, vector<1x128xf32>
    %c13 = arith.constant 13 : index
    %c0_14 = arith.constant 0 : index
    %14 = vector.load %arg5[%c13, %c0_14] : memref<16x128xf32, #tpu.memory_space<vmem>>, vector<1x128xf32>
    %c14 = arith.constant 14 : index
    %c0_15 = arith.constant 0 : index
    %15 = vector.load %arg5[%c14, %c0_15] : memref<16x128xf32, #tpu.memory_space<vmem>>, vector<1x128xf32>
    %c0_16 = arith.constant 0 : index
    %c0_17 = arith.constant 0 : index
    %16 = vector.load %arg6[%c0_16, %c0_17] : memref<2x512xf32, #tpu.memory_space<vmem>>, vector<1x384xf32>
    %c1_18 = arith.constant 1 : index
    %c0_19 = arith.constant 0 : index
    %17 = vector.load %arg6[%c1_18, %c0_19] : memref<2x512xf32, #tpu.memory_space<vmem>>, vector<1x512xf32>
    %c0_20 = arith.constant 0 : index
    %c0_21 = arith.constant 0 : index
    %18 = vector.load %arg3[%c0_20, %c0_21] : memref<128x1408xbf16, #tpu.memory_space<vmem>>, vector<128x384xbf16>
    %c0_22 = arith.constant 0 : index
    %c384 = arith.constant 384 : index
    %19 = vector.load %arg3[%c0_22, %c384] : memref<128x1408xbf16, #tpu.memory_space<vmem>>, vector<128x512xbf16>
    %c0_23 = arith.constant 0 : index
    %c896 = arith.constant 896 : index
    %20 = vector.load %arg3[%c0_23, %c896] : memref<128x1408xbf16, #tpu.memory_space<vmem>>, vector<128x128xbf16>
    %c0_24 = arith.constant 0 : index
    %c1024 = arith.constant 1024 : index
    %21 = vector.load %arg3[%c0_24, %c1024] : memref<128x1408xbf16, #tpu.memory_space<vmem>>, vector<128x128xbf16>
    %c0_25 = arith.constant 0 : index
    %c1152 = arith.constant 1152 : index
    %22 = vector.load %arg3[%c0_25, %c1152] : memref<128x1408xbf16, #tpu.memory_space<vmem>>, vector<128x128xbf16>
    %c0_26 = arith.constant 0 : index
    %c1280 = arith.constant 1280 : index
    %23 = vector.load %arg3[%c0_26, %c1280] : memref<128x1408xbf16, #tpu.memory_space<vmem>>, vector<128x128xbf16>
    %c0_27 = arith.constant 0 : index
    %c0_28 = arith.constant 0 : index
    %24 = vector.load %arg4[%c0_27, %c0_28] : memref<512x128xbf16, #tpu.memory_space<vmem>>, vector<512x128xbf16>
    %c0_29 = arith.constant 0 : index
    %c0_30 = arith.constant 0 : index
    %25 = vector.load %arg1[%c0_29, %c0_30] : memref<16x2xf32, #tpu.memory_space<vmem>>, vector<16x2xf32>
    %26 = vector.extract_strided_slice %25 {offsets = [0, 0], sizes = [16, 1], strides = [1, 1]} : vector<16x2xf32> to vector<16x1xf32>
    %27 = vector.broadcast %26 : vector<16x1xf32> to vector<16x128xf32>
    %28 = vector.broadcast %1 : vector<1x128xf32> to vector<16x128xf32>
    %29 = arith.mulf %27, %28 : vector<16x128xf32>
    %30 = vector.extract_strided_slice %25 {offsets = [0, 1], sizes = [16, 1], strides = [1, 1]} : vector<16x2xf32> to vector<16x1xf32>
    %31 = vector.broadcast %30 : vector<16x1xf32> to vector<16x128xf32>
    %32 = vector.broadcast %2 : vector<1x128xf32> to vector<16x128xf32>
    %33 = arith.mulf %31, %32 : vector<16x128xf32>
    %34 = arith.addf %29, %33 : vector<16x128xf32>
    %35 = vector.broadcast %5 : vector<1x128xf32> to vector<16x128xf32>
    %36 = arith.addf %34, %35 : vector<16x128xf32>
    %37 = arith.truncf %36 : vector<16x128xf32> to vector<16x128xbf16>
    %cst = arith.constant dense<0.000000e+00> : vector<16x384xf32>
    %38 = tpu.matmul %37, %18, %cst {dimension_numbers = #tpu.dot_dimension_numbers<[1], [0], [0], [1], [0, 0, 1, 1], [], []>} : vector<16x128xbf16>, vector<128x384xbf16>, vector<16x384xf32> -> vector<16x384xf32>
    %39 = vector.broadcast %16 : vector<1x384xf32> to vector<16x384xf32>
    %40 = arith.addf %38, %39 : vector<16x384xf32>
    %41 = vector.extract_strided_slice %40 {offsets = [0, 0], sizes = [16, 128], strides = [1, 1]} : vector<16x384xf32> to vector<16x128xf32>
    %42 = vector.extract_strided_slice %40 {offsets = [0, 128], sizes = [16, 128], strides = [1, 1]} : vector<16x384xf32> to vector<16x128xf32>
    %43 = vector.extract_strided_slice %40 {offsets = [0, 256], sizes = [16, 128], strides = [1, 1]} : vector<16x384xf32> to vector<16x128xf32>
    %44 = arith.truncf %41 : vector<16x128xf32> to vector<16x128xbf16>
    %45 = arith.truncf %42 : vector<16x128xf32> to vector<16x128xbf16>
    %cst_31 = arith.constant dense<0.000000e+00> : vector<16x16xf32>
    %46 = tpu.matmul %44, %45, %cst_31 {dimension_numbers = #tpu.dot_dimension_numbers<[1], [1], [0], [0], [0, 0, 1, 0], [], []>} : vector<16x128xbf16>, vector<16x128xbf16>, vector<16x16xf32> -> vector<16x16xf32>
    %cst_32 = arith.constant 0.0883883461 : f32
    %47 = vector.broadcast %cst_32 : f32 to vector<16x16xf32>
    %48 = arith.mulf %46, %47 : vector<16x16xf32>
    %49 = tpu.iota {dimensions = array<i32: 1>} : vector<1x16xi32>
    %50 = vector.broadcast %0 : i32 to vector<1x16xi32>
    %51 = arith.cmpi slt, %49, %50 : vector<1x16xi32>
    %cst_33 = arith.constant -1.000000e+30 : f32
    %52 = vector.shape_cast %51 : vector<1x16xi1> to vector<1x16xi1>
    %53 = vector.broadcast %52 : vector<1x16xi1> to vector<16x16xi1>
    %54 = vector.broadcast %cst_33 : f32 to vector<16x16xf32>
    %55 = arith.select %53, %48, %54 : vector<16x16xi1>, vector<16x16xf32>
    %cst_34 = arith.constant dense<0xFF800000> : vector<16xf32>
    %56 = vector.multi_reduction <maximumf>, %55, %cst_34 [1] : vector<16x16xf32> to vector<16xf32>
    %57 = vector.shape_cast %56 : vector<16xf32> to vector<16x1xf32>
    %58 = vector.broadcast %57 : vector<16x1xf32> to vector<16x16xf32>
    %59 = arith.subf %55, %58 : vector<16x16xf32>
    %60 = math.exp %59 : vector<16x16xf32>
    %cst_35 = arith.constant dense<0.000000e+00> : vector<16xf32>
    %61 = vector.multi_reduction <add>, %60, %cst_35 [1] : vector<16x16xf32> to vector<16xf32>
    %62 = vector.shape_cast %61 : vector<16xf32> to vector<16x1xf32>
    %63 = vector.broadcast %62 : vector<16x1xf32> to vector<16x16xf32>
    %64 = arith.divf %60, %63 : vector<16x16xf32>
    %65 = arith.truncf %64 : vector<16x16xf32> to vector<16x16xbf16>
    %66 = arith.truncf %43 : vector<16x128xf32> to vector<16x128xbf16>
    %cst_36 = arith.constant dense<0.000000e+00> : vector<16x128xf32>
    %67 = tpu.matmul %65, %66, %cst_36 {dimension_numbers = #tpu.dot_dimension_numbers<[1], [0], [0], [1], [0, 0, 1, 1], [], []>} : vector<16x16xbf16>, vector<16x128xbf16>, vector<16x128xf32> -> vector<16x128xf32>
    %68 = vector.broadcast %6 : vector<1x128xf32> to vector<16x128xf32>
    %69 = arith.addf %67, %68 : vector<16x128xf32>
    %70 = arith.addf %36, %69 : vector<16x128xf32>
    %cst_37 = arith.constant dense<0.000000e+00> : vector<16xf32>
    %71 = vector.multi_reduction <add>, %70, %cst_37 [1] : vector<16x128xf32> to vector<16xf32>
    %72 = vector.shape_cast %71 : vector<16xf32> to vector<16x1xf32>
    %cst_38 = arith.constant 1.280000e+02 : f32
    %73 = vector.broadcast %cst_38 : f32 to vector<16x1xf32>
    %74 = arith.divf %72, %73 : vector<16x1xf32>
    %75 = vector.broadcast %74 : vector<16x1xf32> to vector<16x128xf32>
    %76 = arith.subf %70, %75 : vector<16x128xf32>
    %77 = vector.broadcast %74 : vector<16x1xf32> to vector<16x128xf32>
    %78 = arith.subf %70, %77 : vector<16x128xf32>
    %79 = arith.mulf %76, %78 : vector<16x128xf32>
    %cst_39 = arith.constant dense<0.000000e+00> : vector<16xf32>
    %80 = vector.multi_reduction <add>, %79, %cst_39 [1] : vector<16x128xf32> to vector<16xf32>
    %81 = vector.shape_cast %80 : vector<16xf32> to vector<16x1xf32>
    %cst_40 = arith.constant 1.280000e+02 : f32
    %82 = vector.broadcast %cst_40 : f32 to vector<16x1xf32>
    %83 = arith.divf %81, %82 : vector<16x1xf32>
    %84 = vector.broadcast %74 : vector<16x1xf32> to vector<16x128xf32>
    %85 = arith.subf %70, %84 : vector<16x128xf32>
    %cst_41 = arith.constant 9.99999974E-6 : f32
    %86 = vector.broadcast %cst_41 : f32 to vector<16x1xf32>
    %87 = arith.addf %83, %86 : vector<16x1xf32>
    %88 = math.rsqrt %87 : vector<16x1xf32>
    %89 = vector.broadcast %88 : vector<16x1xf32> to vector<16x128xf32>
    %90 = arith.mulf %85, %89 : vector<16x128xf32>
    %91 = vector.broadcast %7 : vector<1x128xf32> to vector<16x128xf32>
    %92 = arith.mulf %90, %91 : vector<16x128xf32>
    %93 = vector.broadcast %8 : vector<1x128xf32> to vector<16x128xf32>
    %94 = arith.addf %92, %93 : vector<16x128xf32>
    %95 = arith.truncf %94 : vector<16x128xf32> to vector<16x128xbf16>
    %cst_42 = arith.constant dense<0.000000e+00> : vector<16x512xf32>
    %96 = tpu.matmul %95, %19, %cst_42 {dimension_numbers = #tpu.dot_dimension_numbers<[1], [0], [0], [1], [0, 0, 1, 1], [], []>} : vector<16x128xbf16>, vector<128x512xbf16>, vector<16x512xf32> -> vector<16x512xf32>
    %97 = vector.broadcast %17 : vector<1x512xf32> to vector<16x512xf32>
    %98 = arith.addf %96, %97 : vector<16x512xf32>
    %cst_43 = arith.constant 5.000000e-01 : f32
    %99 = vector.broadcast %cst_43 : f32 to vector<16x512xf32>
    %100 = arith.mulf %99, %98 : vector<16x512xf32>
    %cst_44 = arith.constant 4.471500e-02 : f32
    %101 = vector.broadcast %cst_44 : f32 to vector<16x512xf32>
    %102 = arith.mulf %101, %98 : vector<16x512xf32>
    %103 = arith.mulf %102, %98 : vector<16x512xf32>
    %104 = arith.mulf %103, %98 : vector<16x512xf32>
    %105 = arith.addf %98, %104 : vector<16x512xf32>
    %cst_45 = arith.constant 0.797884583 : f32
    %106 = vector.broadcast %cst_45 : f32 to vector<16x512xf32>
    %107 = arith.mulf %106, %105 : vector<16x512xf32>
    %108 = math.tanh %107 : vector<16x512xf32>
    %cst_46 = arith.constant 1.000000e+00 : f32
    %109 = vector.broadcast %cst_46 : f32 to vector<16x512xf32>
    %110 = arith.addf %109, %108 : vector<16x512xf32>
    %111 = arith.mulf %100, %110 : vector<16x512xf32>
    %112 = arith.truncf %111 : vector<16x512xf32> to vector<16x512xbf16>
    %cst_47 = arith.constant dense<0.000000e+00> : vector<16x128xf32>
    %113 = tpu.matmul %112, %24, %cst_47 {dimension_numbers = #tpu.dot_dimension_numbers<[1], [0], [0], [1], [0, 0, 1, 1], [], []>} : vector<16x512xbf16>, vector<512x128xbf16>, vector<16x128xf32> -> vector<16x128xf32>
    %114 = vector.broadcast %9 : vector<1x128xf32> to vector<16x128xf32>
    %115 = arith.addf %113, %114 : vector<16x128xf32>
    %116 = arith.addf %94, %115 : vector<16x128xf32>
    %cst_48 = arith.constant dense<0.000000e+00> : vector<16xf32>
    %117 = vector.multi_reduction <add>, %116, %cst_48 [1] : vector<16x128xf32> to vector<16xf32>
    %118 = vector.shape_cast %117 : vector<16xf32> to vector<16x1xf32>
    %cst_49 = arith.constant 1.280000e+02 : f32
    %119 = vector.broadcast %cst_49 : f32 to vector<16x1xf32>
    %120 = arith.divf %118, %119 : vector<16x1xf32>
    %121 = vector.broadcast %120 : vector<16x1xf32> to vector<16x128xf32>
    %122 = arith.subf %116, %121 : vector<16x128xf32>
    %123 = vector.broadcast %120 : vector<16x1xf32> to vector<16x128xf32>
    %124 = arith.subf %116, %123 : vector<16x128xf32>
    %125 = arith.mulf %122, %124 : vector<16x128xf32>
    %cst_50 = arith.constant dense<0.000000e+00> : vector<16xf32>
    %126 = vector.multi_reduction <add>, %125, %cst_50 [1] : vector<16x128xf32> to vector<16xf32>
    %127 = vector.shape_cast %126 : vector<16xf32> to vector<16x1xf32>
    %cst_51 = arith.constant 1.280000e+02 : f32
    %128 = vector.broadcast %cst_51 : f32 to vector<16x1xf32>
    %129 = arith.divf %127, %128 : vector<16x1xf32>
    %130 = vector.broadcast %120 : vector<16x1xf32> to vector<16x128xf32>
    %131 = arith.subf %116, %130 : vector<16x128xf32>
    %cst_52 = arith.constant 9.99999974E-6 : f32
    %132 = vector.broadcast %cst_52 : f32 to vector<16x1xf32>
    %133 = arith.addf %129, %132 : vector<16x1xf32>
    %134 = math.rsqrt %133 : vector<16x1xf32>
    %135 = vector.broadcast %134 : vector<16x1xf32> to vector<16x128xf32>
    %136 = arith.mulf %131, %135 : vector<16x128xf32>
    %137 = vector.broadcast %10 : vector<1x128xf32> to vector<16x128xf32>
    %138 = arith.mulf %136, %137 : vector<16x128xf32>
    %139 = vector.broadcast %11 : vector<1x128xf32> to vector<16x128xf32>
    %140 = arith.addf %138, %139 : vector<16x128xf32>
    %141 = arith.extui %51 : vector<1x16xi1> to vector<1x16xi32>
    %142 = arith.sitofp %141 : vector<1x16xi32> to vector<1x16xf32>
    %cst_53 = arith.constant dense<0.000000e+00> : vector<1x128xf32>
    %143 = tpu.matmul %142, %140, %cst_53 {dimension_numbers = #tpu.dot_dimension_numbers<[1], [0], [0], [1], [0, 0, 1, 1], [], []>} : vector<1x16xf32>, vector<16x128xf32>, vector<1x128xf32> -> vector<1x128xf32>
    %c1_i32 = arith.constant 1 : i32
    %144 = arith.maxsi %0, %c1_i32 : i32
    %145 = arith.sitofp %144 : i32 to f32
    %cst_54 = arith.constant 1.000000e+00 : f32
    %146 = arith.divf %cst_54, %145 : f32
    %147 = vector.broadcast %146 : f32 to vector<1x128xf32>
    %148 = arith.mulf %143, %147 : vector<1x128xf32>
    %c0_55 = arith.constant 0 : index
    %c0_56 = arith.constant 0 : index
    %149 = vector.load %arg2[%c0_55, %c0_56] : memref<8x2xf32, #tpu.memory_space<vmem>>, vector<8x2xf32>
    %150 = vector.extract_strided_slice %149 {offsets = [0, 0], sizes = [8, 1], strides = [1, 1]} : vector<8x2xf32> to vector<8x1xf32>
    %151 = vector.broadcast %150 : vector<8x1xf32> to vector<8x128xf32>
    %152 = vector.broadcast %3 : vector<1x128xf32> to vector<8x128xf32>
    %153 = arith.mulf %151, %152 : vector<8x128xf32>
    %154 = vector.extract_strided_slice %149 {offsets = [0, 1], sizes = [8, 1], strides = [1, 1]} : vector<8x2xf32> to vector<8x1xf32>
    %155 = vector.broadcast %154 : vector<8x1xf32> to vector<8x128xf32>
    %156 = vector.broadcast %4 : vector<1x128xf32> to vector<8x128xf32>
    %157 = arith.mulf %155, %156 : vector<8x128xf32>
    %158 = arith.addf %153, %157 : vector<8x128xf32>
    %159 = vector.broadcast %12 : vector<1x128xf32> to vector<8x128xf32>
    %160 = arith.addf %158, %159 : vector<8x128xf32>
    %cst_57 = arith.constant 5.000000e-01 : f32
    %161 = vector.broadcast %cst_57 : f32 to vector<8x128xf32>
    %162 = arith.mulf %161, %160 : vector<8x128xf32>
    %cst_58 = arith.constant 4.471500e-02 : f32
    %163 = vector.broadcast %cst_58 : f32 to vector<8x128xf32>
    %164 = arith.mulf %163, %160 : vector<8x128xf32>
    %165 = arith.mulf %164, %160 : vector<8x128xf32>
    %166 = arith.mulf %165, %160 : vector<8x128xf32>
    %167 = arith.addf %160, %166 : vector<8x128xf32>
    %cst_59 = arith.constant 0.797884583 : f32
    %168 = vector.broadcast %cst_59 : f32 to vector<8x128xf32>
    %169 = arith.mulf %168, %167 : vector<8x128xf32>
    %170 = math.tanh %169 : vector<8x128xf32>
    %cst_60 = arith.constant 1.000000e+00 : f32
    %171 = vector.broadcast %cst_60 : f32 to vector<8x128xf32>
    %172 = arith.addf %171, %170 : vector<8x128xf32>
    %173 = arith.mulf %162, %172 : vector<8x128xf32>
    %174 = arith.truncf %148 : vector<1x128xf32> to vector<1x128xbf16>
    %cst_61 = arith.constant dense<0.000000e+00> : vector<1x128xf32>
    %175 = tpu.matmul %174, %20, %cst_61 {dimension_numbers = #tpu.dot_dimension_numbers<[1], [0], [0], [1], [0, 0, 1, 1], [], []>} : vector<1x128xbf16>, vector<128x128xbf16>, vector<1x128xf32> -> vector<1x128xf32>
    %176 = arith.truncf %173 : vector<8x128xf32> to vector<8x128xbf16>
    %cst_62 = arith.constant dense<0.000000e+00> : vector<8x128xf32>
    %177 = tpu.matmul %176, %21, %cst_62 {dimension_numbers = #tpu.dot_dimension_numbers<[1], [0], [0], [1], [0, 0, 1, 1], [], []>} : vector<8x128xbf16>, vector<128x128xbf16>, vector<8x128xf32> -> vector<8x128xf32>
    %178 = vector.broadcast %175 : vector<1x128xf32> to vector<8x128xf32>
    %179 = arith.addf %178, %177 : vector<8x128xf32>
    %180 = vector.broadcast %13 : vector<1x128xf32> to vector<8x128xf32>
    %181 = arith.addf %179, %180 : vector<8x128xf32>
    %cst_63 = arith.constant 5.000000e-01 : f32
    %182 = vector.broadcast %cst_63 : f32 to vector<8x128xf32>
    %183 = arith.mulf %182, %181 : vector<8x128xf32>
    %cst_64 = arith.constant 4.471500e-02 : f32
    %184 = vector.broadcast %cst_64 : f32 to vector<8x128xf32>
    %185 = arith.mulf %184, %181 : vector<8x128xf32>
    %186 = arith.mulf %185, %181 : vector<8x128xf32>
    %187 = arith.mulf %186, %181 : vector<8x128xf32>
    %188 = arith.addf %181, %187 : vector<8x128xf32>
    %cst_65 = arith.constant 0.797884583 : f32
    %189 = vector.broadcast %cst_65 : f32 to vector<8x128xf32>
    %190 = arith.mulf %189, %188 : vector<8x128xf32>
    %191 = math.tanh %190 : vector<8x128xf32>
    %cst_66 = arith.constant 1.000000e+00 : f32
    %192 = vector.broadcast %cst_66 : f32 to vector<8x128xf32>
    %193 = arith.addf %192, %191 : vector<8x128xf32>
    %194 = arith.mulf %183, %193 : vector<8x128xf32>
    %195 = arith.truncf %194 : vector<8x128xf32> to vector<8x128xbf16>
    %cst_67 = arith.constant dense<0.000000e+00> : vector<8x128xf32>
    %196 = tpu.matmul %195, %22, %cst_67 {dimension_numbers = #tpu.dot_dimension_numbers<[1], [0], [0], [1], [0, 0, 1, 1], [], []>} : vector<8x128xbf16>, vector<128x128xbf16>, vector<8x128xf32> -> vector<8x128xf32>
    %197 = vector.broadcast %14 : vector<1x128xf32> to vector<8x128xf32>
    %198 = arith.addf %196, %197 : vector<8x128xf32>
    %cst_68 = arith.constant 5.000000e-01 : f32
    %199 = vector.broadcast %cst_68 : f32 to vector<8x128xf32>
    %200 = arith.mulf %199, %198 : vector<8x128xf32>
    %cst_69 = arith.constant 4.471500e-02 : f32
    %201 = vector.broadcast %cst_69 : f32 to vector<8x128xf32>
    %202 = arith.mulf %201, %198 : vector<8x128xf32>
    %203 = arith.mulf %202, %198 : vector<8x128xf32>
    %204 = arith.mulf %203, %198 : vector<8x128xf32>
    %205 = arith.addf %198, %204 : vector<8x128xf32>
    %cst_70 = arith.constant 0.797884583 : f32
    %206 = vector.broadcast %cst_70 : f32 to vector<8x128xf32>
    %207 = arith.mulf %206, %205 : vector<8x128xf32>
    %208 = math.tanh %207 : vector<8x128xf32>
    %cst_71 = arith.constant 1.000000e+00 : f32
    %209 = vector.broadcast %cst_71 : f32 to vector<8x128xf32>
    %210 = arith.addf %209, %208 : vector<8x128xf32>
    %211 = arith.mulf %200, %210 : vector<8x128xf32>
    %212 = arith.truncf %211 : vector<8x128xf32> to vector<8x128xbf16>
    %cst_72 = arith.constant dense<0.000000e+00> : vector<8x128xf32>
    %213 = tpu.matmul %212, %23, %cst_72 {dimension_numbers = #tpu.dot_dimension_numbers<[1], [0], [0], [1], [0, 0, 1, 1], [], []>} : vector<8x128xbf16>, vector<128x128xbf16>, vector<8x128xf32> -> vector<8x128xf32>
    %214 = vector.broadcast %15 : vector<1x128xf32> to vector<8x128xf32>
    %215 = arith.addf %213, %214 : vector<8x128xf32>
    %c0_73 = arith.constant 0 : index
    %c0_74 = arith.constant 0 : index
    %216 = vector.load %arg7[%c0_73, %c0_74] : memref<8x128xf32, #tpu.memory_space<vmem>>, vector<8x128xf32>
    tpu.vector_store %arg7[%c0_73, %c0_74], %215 {strides = array<i32>} : memref<8x128xf32, #tpu.memory_space<vmem>>, vector<8x128xf32>,
    return
  }
}

</mosaic_0001>

<llo_original>
// kernel: transformer_mlp_forward.1
$region0: #{transformer_mlp_forward.1}
  #allocation0 [shape = 'u32[]', space=smem, size = 0x4, offset = 0x4, fixed_abs, tag = 'smem constant byte address 0x4 - core index']
  #allocation1 [shape = 'u32[144,128]{1,0:T(1,128)}', space=vmem, size = 0x12000, scoped, tag = 'internal scratch']
  #allocation2 [shape = 's32[1]{0:T(128)S(6)}', space=smem, size = 0x200, scoped, tag = 'scoped memory for transformer_mlp_forward.1']
  %s0 = inlined_call_operand.<no memory space> [shape: s32[1], index: 0, kind: input, shape index: {}]
  %s1 = inlined_call_operand.vmem [shape: f32[16,2], index: 1, kind: input, shape index: {}]
  %s2 = inlined_call_operand.vmem [shape: f32[8,2], index: 2, kind: input, shape index: {}]
  %s3 = inlined_call_operand.hbm [shape: bf16[128,1408], index: 3, kind: input, shape index: {}]
  %s4 = inlined_call_operand.hbm [shape: bf16[512,128], index: 4, kind: input, shape index: {}]
  %s5 = inlined_call_operand.vmem [shape: f32[16,128], index: 5, kind: input, shape index: {}]
  %s6 = inlined_call_operand.vmem [shape: f32[2,512], index: 6, kind: input, shape index: {}]
  %s7 = inlined_call_operand.vmem [shape: f32[8,128], index: 7, kind: output, shape index: {}]
  %s8 = sld [smem:[#allocation0]]
  $region46: #{transformer_mlp_forward.1} parent=0
    _
  %s10 = ssub.s32 1, %s8
  %s11 = scalar_select 0, %s10, %s8
  %12 = sst [smem:[#allocation2]] %s0
  $region1: #{transformer_mlp_forward.1} parent=0
    #allocation3 [shape = 'u8[360448]{0}', space=vmem, size = 0x58000, scoped, tag = 'input window, operand 3, single buffered']
    #allocation4 [shape = 's32[1]{0}', space=sflag, size = 0x4, scoped, tag = 'scoped memory for transformer_mlp_forward.1']
    #allocation5 [shape = 'u8[131072]{0}', space=vmem, size = 0x20000, scoped, tag = 'input window, operand 4, single buffered']
    #allocation6 [shape = 's32[1]{0}', space=sflag, size = 0x4, scoped, tag = 'scoped memory for transformer_mlp_forward.1']
    %13 = vsyncpa [#allocation4], 0
    %14 = vsyncpa [#allocation6], 0
    // Predicated region
    $region2: #{transformer_mlp_forward.1} parent=1 // pred_check
      _
    $region3: #{transformer_mlp_forward.1} parent=1 // pred_check_branch
      %16 = sbr.rel (0) target = $region5
    $region4: #{transformer_mlp_forward.1} parent=1 // pred_region
      _
    $region5: #{transformer_mlp_forward.1} parent=1 // pred_fallthru
      _
    // Predicated region
    $region6: #{transformer_mlp_forward.1} parent=1 // pred_check
      _
    $region7: #{transformer_mlp_forward.1} parent=1 // pred_check_branch
      %18 = sbr.rel (0) target = $region9
    $region8: #{transformer_mlp_forward.1} parent=1 // pred_region
      _
    $region9: #{transformer_mlp_forward.1} parent=1 // pred_fallthru
      _
    // Predicated region
    $region10: #{transformer_mlp_forward.1} parent=1 // pred_check
      _
    $region11: #{transformer_mlp_forward.1} parent=1 // pred_check_branch
      %20 = sbr.rel (0) target = $region13
    $region12: #{transformer_mlp_forward.1} parent=1 // pred_region
      _
    $region13: #{transformer_mlp_forward.1} parent=1 // pred_fallthru
      _
    // Predicated region
    $region14: #{transformer_mlp_forward.1} parent=1 // pred_check
      _
    $region15: #{transformer_mlp_forward.1} parent=1 // pred_check_branch
      %22 = sbr.rel (0) target = $region17
    $region16: #{transformer_mlp_forward.1} parent=1 // pred_region
      %s24 = ssub.s32 11264, 11264
      %25 = vsyncadd [#allocation4], %s24
      %s26 = sshll.u32 [#allocation3], 4
      %s27 = int_to_ptr.vmem [resolvable:$true] %s26
      %32 = dma.hbm_to_vmem [thread:$0]  %s3, 11264, %s27, [#allocation4], 704, 704, 44
    $region17: #{transformer_mlp_forward.1} parent=1 // pred_fallthru
      _
    // Predicated region
    $region18: #{transformer_mlp_forward.1} parent=1 // pred_check
      _
    $region19: #{transformer_mlp_forward.1} parent=1 // pred_check_branch
      %34 = sbr.rel (0) target = $region21
    $region20: #{transformer_mlp_forward.1} parent=1 // pred_region
      %s36 = ssub.s32 4096, 4096
      %37 = vsyncadd [#allocation6], %s36
      %s38 = sshll.u32 [#allocation5], 4
      %s39 = int_to_ptr.vmem [resolvable:$true] %s38
      %44 = dma.hbm_to_vmem [thread:$0]  %s4, 4096, %s39, [#allocation6], 64, 64, 4
    $region21: #{transformer_mlp_forward.1} parent=1 // pred_fallthru
      _
    // Predicated region
    $region22: #{transformer_mlp_forward.1} parent=1 // pred_check
      _
    $region23: #{transformer_mlp_forward.1} parent=1 // pred_check_branch
      %46 = sbr.rel (0) target = $region25
    $region24: #{transformer_mlp_forward.1} parent=1 // pred_region
      _
    $region25: #{transformer_mlp_forward.1} parent=1 // pred_fallthru
      _
    // Predicated region
    $region26: #{transformer_mlp_forward.1} parent=1 // pred_check
      _
    $region27: #{transformer_mlp_forward.1} parent=1 // pred_check_branch
      %48 = sbr.rel (0) target = $region29
    $region28: #{transformer_mlp_forward.1} parent=1 // pred_region
      _
    $region29: #{transformer_mlp_forward.1} parent=1 // pred_fallthru
      _
    // Predicated region
    $region30: #{transformer_mlp_forward.1} parent=1 // pred_check
      _
    $region31: #{transformer_mlp_forward.1} parent=1 // pred_check_branch
      %50 = sbr.rel (0) target = $region33
    $region32: #{transformer_mlp_forward.1} parent=1 // pred_region
      %51 = dma.done [#allocation4], 11264
    $region33: #{transformer_mlp_forward.1} parent=1 // pred_fallthru
      _
    // Predicated region
    $region34: #{transformer_mlp_forward.1} parent=1 // pred_check
      _
    $region35: #{transformer_mlp_forward.1} parent=1 // pred_check_branch
      %53 = sbr.rel (0) target = $region37
    $region36: #{transformer_mlp_forward.1} parent=1 // pred_region
      %54 = dma.done [#allocation6], 4096
    $region37: #{transformer_mlp_forward.1} parent=1 // pred_fallthru
      _
    %s56 = sld [smem:[#allocation2]]
    %v57 = vld [vmem:[%s5] sm:$0x1]
    %v58 = vld [vmem:[%s5 + $0x1] sm:$0x1]
    %v59 = vld [vmem:[%s5 + $0x2] sm:$0x1]
    %v60 = vld [vmem:[%s5 + $0x3] sm:$0x1]
    %v61 = vld [vmem:[%s5 + $0x4] sm:$0x1]
    %v62 = vld [vmem:[%s5 + $0x5] sm:$0x1]
    %v63 = vld [vmem:[%s5 + $0x6] sm:$0x1]
    %v64 = vld [vmem:[%s5 + $0x7] sm:$0x1]
    %v65 = vld [vmem:[%s5 + $0x8] sm:$0x1]
    %v66 = vld [vmem:[%s5 + $0x9] sm:$0x1]
    %v67 = vld [vmem:[%s5 + $0xa] sm:$0x1]
    %v68 = vld [vmem:[%s5 + $0xb] sm:$0x1]
    %v69 = vld [vmem:[%s5 + $0xc] sm:$0x1]
    %v70 = vld [vmem:[%s5 + $0xd] sm:$0x1]
    %v71 = vld [vmem:[%s5 + $0xe] sm:$0x1]
    %v72 = vld [vmem:[%s6] ss:$2 sm:$0x7]
    %s73 = scalar_lea.vmem %s6, 1
    %v74 = vld [vmem:[%s73] ss:$2 sm:$0xf]
    %v75 = vld [vmem:[#allocation3] sm:$0xff]
    %v76 = vld [vmem:[#allocation3 + $0x8] sm:$0xf]
    %v77 = vld [vmem:[#allocation3 + $0x2c] sm:$0xff]
    %v78 = vld [vmem:[#allocation3 + $0x34] sm:$0xf]
    %v79 = vld [vmem:[#allocation3 + $0x58] sm:$0xff]
    %v80 = vld [vmem:[#allocation3 + $0x60] sm:$0xf]
    %v81 = vld [vmem:[#allocation3 + $0x84] sm:$0xff]
    %v82 = vld [vmem:[#allocation3 + $0x8c] sm:$0xf]
    %v83 = vld [vmem:[#allocation3 + $0xb0] sm:$0xff]
    %v84 = vld [vmem:[#allocation3 + $0xb8] sm:$0xf]
    %v85 = vld [vmem:[#allocation3 + $0xdc] sm:$0xff]
    %v86 = vld [vmem:[#allocation3 + $0xe4] sm:$0xf]
    %v87 = vld [vmem:[#allocation3 + $0x108] sm:$0xff]
    %v88 = vld [vmem:[#allocation3 + $0x110] sm:$0xf]
    %v89 = vld [vmem:[#allocation3 + $0x134] sm:$0xff]
    %v90 = vld [vmem:[#allocation3 + $0x13c] sm:$0xf]
    %v91 = vld [vmem:[#allocation3 + $0x160] sm:$0xff]
    %v92 = vld [vmem:[#allocation3 + $0x168] sm:$0xf]
    %v93 = vld [vmem:[#allocation3 + $0x18c] sm:$0xff]
    %v94 = vld [vmem:[#allocation3 + $0x194] sm:$0xf]
    %v95 = vld [vmem:[#allocation3 + $0x1b8] sm:$0xff]
    %v96 = vld [vmem:[#allocation3 + $0x1c0] sm:$0xf]
    %v97 = vld [vmem:[#allocation3 + $0x1e4] sm:$0xff]
    %v98 = vld [vmem:[#allocation3 + $0x1ec] sm:$0xf]
    %v99 = vld [vmem:[#allocation3 + $0x210] sm:$0xff]
    %v100 = vld [vmem:[#allocation3 + $0x218] sm:$0xf]
    %v101 = vld [vmem:[#allocation3 + $0x23c] sm:$0xff]
    %v102 = vld [vmem:[#allocation3 + $0x244] sm:$0xf]
    %v103 = vld [vmem:[#allocation3 + $0x268] sm:$0xff]
    %v104 = vld [vmem:[#allocation3 + $0x270] sm:$0xf]
    %v105 = vld [vmem:[#allocation3 + $0x294] sm:$0xff]
    %v106 = vld [vmem:[#allocation3 + $0x29c] sm:$0xf]
    %v107 = vld [vmem:[#allocation3 + $0xc] sm:$0xff]
    %v108 = vld [vmem:[#allocation3 + $0x14] sm:$0xff]
    %v109 = vld [vmem:[#allocation3 + $0x38] sm:$0xff]
    %v110 = vld [vmem:[#allocation3 + $0x40] sm:$0xff]
    %v111 = vld [vmem:[#allocation3 + $0x64] sm:$0xff]
    %v112 = vld [vmem:[#allocation3 + $0x6c] sm:$0xff]
    %v113 = vld [vmem:[#allocation3 + $0x90] sm:$0xff]
    %v114 = vld [vmem:[#allocation3 + $0x98] sm:$0xff]
    %v115 = vld [vmem:[#allocation3 + $0xbc] sm:$0xff]
    %v116 = vld [vmem:[#allocation3 + $0xc4] sm:$0xff]
    %v117 = vld [vmem:[#allocation3 + $0xe8] sm:$0xff]
    %v118 = vld [vmem:[#allocation3 + $0xf0] sm:$0xff]
    %v119 = vld [vmem:[#allocation3 + $0x114] sm:$0xff]
    %v120 = vld [vmem:[#allocation3 + $0x11c] sm:$0xff]
    %v121 = vld [vmem:[#allocation3 + $0x140] sm:$0xff]
    %v122 = vld [vmem:[#allocation3 + $0x148] sm:$0xff]
    %v123 = vld [vmem:[#allocation3 + $0x16c] sm:$0xff]
    %v124 = vld [vmem:[#allocation3 + $0x174] sm:$0xff]
    %v125 = vld [vmem:[#allocation3 + $0x198] sm:$0xff]
    %v126 = vld [vmem:[#allocation3 + $0x1a0] sm:$0xff]
    %v127 = vld [vmem:[#allocation3 + $0x1c4] sm:$0xff]
    %v128 = vld [vmem:[#allocation3 + $0x1cc] sm:$0xff]
    %v129 = vld [vmem:[#allocation3 + $0x1f0] sm:$0xff]
    %v130 = vld [vmem:[#allocation3 + $0x1f8] sm:$0xff]
    %v131 = vld [vmem:[#allocation3 + $0x21c] sm:$0xff]
    %v132 = vld [vmem:[#allocation3 + $0x224] sm:$0xff]
    %v133 = vld [vmem:[#allocation3 + $0x248] sm:$0xff]
    %v134 = vld [vmem:[#allocation3 + $0x250] sm:$0xff]
    %v135 = vld [vmem:[#allocation3 + $0x274] sm:$0xff]
    %v136 = vld [vmem:[#allocation3 + $0x27c] sm:$0xff]
    %v137 = vld [vmem:[#allocation3 + $0x2a0] sm:$0xff]
    %v138 = vld [vmem:[#allocation3 + $0x2a8] sm:$0xff]
    %v139 = vld [vmem:[#allocation3 + $0x1c] sm:$0xf]
    %v140 = vld [vmem:[#allocation3 + $0x48] sm:$0xf]
    %v141 = vld [vmem:[#allocation3 + $0x74] sm:$0xf]
    %v142 = vld [vmem:[#allocation3 + $0xa0] sm:$0xf]
    %v143 = vld [vmem:[#allocation3 + $0xcc] sm:$0xf]
    %v144 = vld [vmem:[#allocation3 + $0xf8] sm:$0xf]
    %v145 = vld [vmem:[#allocation3 + $0x124] sm:$0xf]
    %v146 = vld [vmem:[#allocation3 + $0x150] sm:$0xf]
    %v147 = vld [vmem:[#allocation3 + $0x17c] sm:$0xf]
    %v148 = vld [vmem:[#allocation3 + $0x1a8] sm:$0xf]
    %v149 = vld [vmem:[#allocation3 + $0x1d4] sm:$0xf]
    %v150 = vld [vmem:[#allocation3 + $0x200] sm:$0xf]
    %v151 = vld [vmem:[#allocation3 + $0x22c] sm:$0xf]
    %v152 = vld [vmem:[#allocation3 + $0x258] sm:$0xf]
    %v153 = vld [vmem:[#allocation3 + $0x284] sm:$0xf]
    %v154 = vld [vmem:[#allocation3 + $0x2b0] sm:$0xf]
    %v155 = vld [vmem:[#allocation3 + $0x20] sm:$0xf]
    %v156 = vld [vmem:[#allocation3 + $0x4c] sm:$0xf]
    %v157 = vld [vmem:[#allocation3 + $0x78] sm:$0xf]
    %v158 = vld [vmem:[#allocation3 + $0xa4] sm:$0xf]
    %v159 = vld [vmem:[#allocation3 + $0xd0] sm:$0xf]
    %v160 = vld [vmem:[#allocation3 + $0xfc] sm:$0xf]
    %v161 = vld [vmem:[#allocation3 + $0x128] sm:$0xf]
    %v162 = vld [vmem:[#allocation3 + $0x154] sm:$0xf]
    %v163 = vld [vmem:[#allocation3 + $0x180] sm:$0xf]
    %v164 = vld [vmem:[#allocation3 + $0x1ac] sm:$0xf]
    %v165 = vld [vmem:[#allocation3 + $0x1d8] sm:$0xf]
    %v166 = vld [vmem:[#allocation3 + $0x204] sm:$0xf]
    %v167 = vld [vmem:[#allocation3 + $0x230] sm:$0xf]
    %v168 = vld [vmem:[#allocation3 + $0x25c] sm:$0xf]
    %v169 = vld [vmem:[#allocation3 + $0x288] sm:$0xf]
    %v170 = vld [vmem:[#allocation3 + $0x2b4] sm:$0xf]
    %v171 = vld [vmem:[#allocation3 + $0x24] sm:$0xf]
    %v172 = vld [vmem:[#allocation3 + $0x50] sm:$0xf]
    %v173 = vld [vmem:[#allocation3 + $0x7c] sm:$0xf]
    %v174 = vld [vmem:[#allocation3 + $0xa8] sm:$0xf]
    %v175 = vld [vmem:[#allocation3 + $0xd4] sm:$0xf]
    %v176 = vld [vmem:[#allocation3 + $0x100] sm:$0xf]
    %v177 = vld [vmem:[#allocation3 + $0x12c] sm:$0xf]
    %v178 = vld [vmem:[#allocation3 + $0x158] sm:$0xf]
    %v179 = vld [vmem:[#allocation3 + $0x184] sm:$0xf]
    %v180 = vld [vmem:[#allocation3 + $0x1b0] sm:$0xf]
    %v181 = vld [vmem:[#allocation3 + $0x1dc] sm:$0xf]
    %v182 = vld [vmem:[#allocation3 + $0x208] sm:$0xf]
    %v183 = vld [vmem:[#allocation3 + $0x234] sm:$0xf]
    %v184 = vld [vmem:[#allocation3 + $0x260] sm:$0xf]
    %v185 = vld [vmem:[#allocation3 + $0x28c] sm:$0xf]
    %v186 = vld [vmem:[#allocation3 + $0x2b8] sm:$0xf]
    %v187 = vld [vmem:[#allocation3 + $0x28] sm:$0xf]
    %v188 = vld [vmem:[#allocation3 + $0x54] sm:$0xf]
    %v189 = vld [vmem:[#allocation3 + $0x80] sm:$0xf]
    %v190 = vld [vmem:[#allocation3 + $0xac] sm:$0xf]
    %v191 = vld [vmem:[#allocation3 + $0xd8] sm:$0xf]
    %v192 = vld [vmem:[#allocation3 + $0x104] sm:$0xf]
    %v193 = vld [vmem:[#allocation3 + $0x130] sm:$0xf]
    %v194 = vld [vmem:[#allocation3 + $0x15c] sm:$0xf]
    %v195 = vld [vmem:[#allocation3 + $0x188] sm:$0xf]
    %v196 = vld [vmem:[#allocation3 + $0x1b4] sm:$0xf]
    %v197 = vld [vmem:[#allocation3 + $0x1e0] sm:$0xf]
    %v198 = vld [vmem:[#allocation3 + $0x20c] sm:$0xf]
    %v199 = vld [vmem:[#allocation3 + $0x238] sm:$0xf]
    %v200 = vld [vmem:[#allocation3 + $0x264] sm:$0xf]
    %v201 = vld [vmem:[#allocation3 + $0x290] sm:$0xf]
    %v202 = vld [vmem:[#allocation3 + $0x2bc] sm:$0xf]
    %v203 = vld [vmem:[#allocation5] sm:$0xf]
    %v204 = vld [vmem:[#allocation5 + $0x4] sm:$0xf]
    %v205 = vld [vmem:[#allocation5 + $0x8] sm:$0xf]
    %v206 = vld [vmem:[#allocation5 + $0xc] sm:$0xf]
    %v207 = vld [vmem:[#allocation5 + $0x10] sm:$0xf]
    %v208 = vld [vmem:[#allocation5 + $0x14] sm:$0xf]
    %v209 = vld [vmem:[#allocation5 + $0x18] sm:$0xf]
    %v210 = vld [vmem:[#allocation5 + $0x1c] sm:$0xf]
    %v211 = vld [vmem:[#allocation5 + $0x20] sm:$0xf]
    %v212 = vld [vmem:[#allocation5 + $0x24] sm:$0xf]
    %v213 = vld [vmem:[#allocation5 + $0x28] sm:$0xf]
    %v214 = vld [vmem:[#allocation5 + $0x2c] sm:$0xf]
    %v215 = vld [vmem:[#allocation5 + $0x30] sm:$0xf]
    %v216 = vld [vmem:[#allocation5 + $0x34] sm:$0xf]
    %v217 = vld [vmem:[#allocation5 + $0x38] sm:$0xf]
    %v218 = vld [vmem:[#allocation5 + $0x3c] sm:$0xf]
    %v219 = vld [vmem:[#allocation5 + $0x40] sm:$0xf]
    %v220 = vld [vmem:[#allocation5 + $0x44] sm:$0xf]
    %v221 = vld [vmem:[#allocation5 + $0x48] sm:$0xf]
    %v222 = vld [vmem:[#allocation5 + $0x4c] sm:$0xf]
    %v223 = vld [vmem:[#allocation5 + $0x50] sm:$0xf]
    %v224 = vld [vmem:[#allocation5 + $0x54] sm:$0xf]
    %v225 = vld [vmem:[#allocation5 + $0x58] sm:$0xf]
    %v226 = vld [vmem:[#allocation5 + $0x5c] sm:$0xf]
    %v227 = vld [vmem:[#allocation5 + $0x60] sm:$0xf]
    %v228 = vld [vmem:[#allocation5 + $0x64] sm:$0xf]
    %v229 = vld [vmem:[#allocation5 + $0x68] sm:$0xf]
    %v230 = vld [vmem:[#allocation5 + $0x6c] sm:$0xf]
    %v231 = vld [vmem:[#allocation5 + $0x70] sm:$0xf]
    %v232 = vld [vmem:[#allocation5 + $0x74] sm:$0xf]
    %v233 = vld [vmem:[#allocation5 + $0x78] sm:$0xf]
    %v234 = vld [vmem:[#allocation5 + $0x7c] sm:$0xf]
    %v235 = vld [vmem:[#allocation5 + $0x80] sm:$0xf]
    %v236 = vld [vmem:[#allocation5 + $0x84] sm:$0xf]
    %v237 = vld [vmem:[#allocation5 + $0x88] sm:$0xf]
    %v238 = vld [vmem:[#allocation5 + $0x8c] sm:$0xf]
    %v239 = vld [vmem:[#allocation5 + $0x90] sm:$0xf]
    %v240 = vld [vmem:[#allocation5 + $0x94] sm:$0xf]
    %v241 = vld [vmem:[#allocation5 + $0x98] sm:$0xf]
    %v242 = vld [vmem:[#allocation5 + $0x9c] sm:$0xf]
    %v243 = vld [vmem:[#allocation5 + $0xa0] sm:$0xf]
    %v244 = vld [vmem:[#allocation5 + $0xa4] sm:$0xf]
    %v245 = vld [vmem:[#allocation5 + $0xa8] sm:$0xf]
    %v246 = vld [vmem:[#allocation5 + $0xac] sm:$0xf]
    %v247 = vld [vmem:[#allocation5 + $0xb0] sm:$0xf]
    %v248 = vld [vmem:[#allocation5 + $0xb4] sm:$0xf]
    %v249 = vld [vmem:[#allocation5 + $0xb8] sm:$0xf]
    %v250 = vld [vmem:[#allocation5 + $0xbc] sm:$0xf]
    %v251 = vld [vmem:[#allocation5 + $0xc0] sm:$0xf]
    %v252 = vld [vmem:[#allocation5 + $0xc4] sm:$0xf]
    %v253 = vld [vmem:[#allocation5 + $0xc8] sm:$0xf]
    %v254 = vld [vmem:[#allocation5 + $0xcc] sm:$0xf]
    %v255 = vld [vmem:[#allocation5 + $0xd0] sm:$0xf]
    %v256 = vld [vmem:[#allocation5 + $0xd4] sm:$0xf]
    %v257 = vld [vmem:[#allocation5 + $0xd8] sm:$0xf]
    %v258 = vld [vmem:[#allocation5 + $0xdc] sm:$0xf]
    %v259 = vld [vmem:[#allocation5 + $0xe0] sm:$0xf]
    %v260 = vld [vmem:[#allocation5 + $0xe4] sm:$0xf]
    %v261 = vld [vmem:[#allocation5 + $0xe8] sm:$0xf]
    %v262 = vld [vmem:[#allocation5 + $0xec] sm:$0xf]
    %v263 = vld [vmem:[#allocation5 + $0xf0] sm:$0xf]
    %v264 = vld [vmem:[#allocation5 + $0xf4] sm:$0xf]
    %v265 = vld [vmem:[#allocation5 + $0xf8] sm:$0xf]
    %v266 = vld [vmem:[#allocation5 + $0xfc] sm:$0xf]
    %v267 = vld [vmem:[%s1] sm:$0xff]
    %v268 = vld [vmem:[%s1 + $0x8] sm:$0xff]
    %270 = vset.pattern.permute.xlu0 0
    %271 = vperm.xlu0 %270, %v267
    %v272 = vpop.permute.xlu0 %271
    %275 = vset.pattern.permute.xlu0 0
    %276 = vperm.xlu0 %275, %v268
    %v277 = vpop.permute.xlu0 %276
    %v279 = vlaneseq
    %v280 = vshrl.u32 %v279, 7
    %v281 = vsub.s32 0, %v280
    %v282 = vrot.slane %v57, %v281
    %v283 = vmul.f32 %v272, %v282
    %v284 = vmul.f32 %v277, %v282
    %285 = vset.pattern.permute.xlu0 1
    %286 = vperm.xlu0 %285, %v267
    %v287 = vpop.permute.xlu0 %286
    %289 = vset.pattern.permute.xlu0 1
    %290 = vperm.xlu0 %289, %v268
    %v291 = vpop.permute.xlu0 %290
    %v293 = vlaneseq
    %v294 = vshrl.u32 %v293, 7
    %v295 = vsub.s32 0, %v294
    %v296 = vrot.slane %v58, %v295
    %v297 = vmul.f32 %v287, %v296
    %v298 = vmul.f32 %v291, %v296
    %v299 = vadd.f32 %v283, %v297
    %v300 = vadd.f32 %v284, %v298
    %v301 = vlaneseq
    %v302 = vshrl.u32 %v301, 7
    %v303 = vsub.s32 0, %v302
    %v304 = vrot.slane %v61, %v303
    %v305 = vadd.f32 %v299, %v304
    %v306 = vadd.f32 %v300, %v304
    %v307 = vpack.c.bf16 %v306, %v305
    %v309 = vlaneseq
    %v310 = vshrl.u32 %v309, 7
    %v311 = vsub.s32 0, %v310
    %v312 = vrot.slane %v72, %v311
    %v313 = vlaneseq
    %v314 = vshrl.u32 %v313, 7
    %v315 = vsub.s32 1, %v314
    %v316 = vrot.slane %v72, %v315
    %v317 = vlaneseq
    %v318 = vshrl.u32 %v317, 7
    %v319 = vsub.s32 2, %v318
    %v320 = vrot.slane %v72, %v319
    %v356 = vunpack.c.l.b16 %v75
    %v357 = vunpack.c.h.b16 %v75
    %v358 = vunpack.c.l.b16 %v76
    %v359 = vunpack.c.l.b16 %v77
    %v360 = vunpack.c.h.b16 %v77
    %v361 = vunpack.c.l.b16 %v78
    %v362 = vunpack.c.l.b16 %v79
    %v363 = vunpack.c.h.b16 %v79
    %v364 = vunpack.c.l.b16 %v80
    %v365 = vunpack.c.l.b16 %v81
    %v366 = vunpack.c.h.b16 %v81
    %v367 = vunpack.c.l.b16 %v82
    %v368 = vunpack.c.l.b16 %v83
    %v369 = vunpack.c.h.b16 %v83
    %v370 = vunpack.c.l.b16 %v84
    %v371 = vunpack.c.l.b16 %v85
    %v372 = vunpack.c.h.b16 %v85
    %v373 = vunpack.c.l.b16 %v86
    %v374 = vunpack.c.l.b16 %v87
    %v375 = vunpack.c.h.b16 %v87
    %v376 = vunpack.c.l.b16 %v88
    %v377 = vunpack.c.l.b16 %v89
    %v378 = vunpack.c.h.b16 %v89
    %v379 = vunpack.c.l.b16 %v90
    %v380 = vunpack.c.l.b16 %v91
    %v381 = vunpack.c.h.b16 %v91
    %v382 = vunpack.c.l.b16 %v92
    %v383 = vunpack.c.l.b16 %v93
    %v384 = vunpack.c.h.b16 %v93
    %v385 = vunpack.c.l.b16 %v94
    %v386 = vunpack.c.l.b16 %v95
    %v387 = vunpack.c.h.b16 %v95
    %v388 = vunpack.c.l.b16 %v96
    %v389 = vunpack.c.l.b16 %v97
    %v390 = vunpack.c.h.b16 %v97
    %v391 = vunpack.c.l.b16 %v98
    %v392 = vunpack.c.l.b16 %v99
    %v393 = vunpack.c.h.b16 %v99
    %v394 = vunpack.c.l.b16 %v100
    %v395 = vunpack.c.l.b16 %v101
    %v396 = vunpack.c.h.b16 %v101
    %v397 = vunpack.c.l.b16 %v102
    %v398 = vunpack.c.l.b16 %v103
    %v399 = vunpack.c.h.b16 %v103
    %v400 = vunpack.c.l.b16 %v104
    %v401 = vunpack.c.l.b16 %v105
    %v402 = vunpack.c.h.b16 %v105
    %v403 = vunpack.c.l.b16 %v106
    %v404 = vpack.c.b16 %v359, %v356
    %v405 = vpack.c.b16 %v360, %v357
    %v406 = vpack.c.b16 %v361, %v358
    %v407 = vpack.c.b16 %v365, %v362
    %v408 = vpack.c.b16 %v366, %v363
    %v409 = vpack.c.b16 %v367, %v364
    %v410 = vpack.c.b16 %v371, %v368
    %v411 = vpack.c.b16 %v372, %v369
    %v412 = vpack.c.b16 %v373, %v370
    %v413 = vpack.c.b16 %v377, %v374
    %v414 = vpack.c.b16 %v378, %v375
    %v415 = vpack.c.b16 %v379, %v376
    %v416 = vpack.c.b16 %v383, %v380
    %v417 = vpack.c.b16 %v384, %v381
    %v418 = vpack.c.b16 %v385, %v382
    %v419 = vpack.c.b16 %v389, %v386
    %v420 = vpack.c.b16 %v390, %v387
    %v421 = vpack.c.b16 %v391, %v388
    %v422 = vpack.c.b16 %v395, %v392
    %v423 = vpack.c.b16 %v396, %v393
    %v424 = vpack.c.b16 %v397, %v394
    %v425 = vpack.c.b16 %v401, %v398
    %v426 = vpack.c.b16 %v402, %v399
    %v427 = vpack.c.b16 %v403, %v400
    %452 = vmatprep.subr.bf16.mxu0 %v426
    %453 = vmatpush1.bf16.msra.mxu0 %v425
    %454 = vmatprep.subr.bf16.mxu0 %v423
    %455 = vmatpush1.bf16.msra.mxu0 %v422
    %456 = vmatprep.subr.bf16.mxu0 %v420
    %457 = vmatpush1.bf16.msra.mxu0 %v419
    %458 = vmatprep.subr.bf16.mxu0 %v417
    %459 = vmatpush1.bf16.msra.mxu0 %v416
    %460 = vmatprep.subr.bf16.mxu0 %v414
    %461 = vmatpush1.bf16.msra.mxu0 %v413
    %462 = vmatprep.subr.bf16.mxu0 %v411
    %463 = vmatpush1.bf16.msra.mxu0 %v410
    %464 = vmatprep.subr.bf16.mxu0 %v408
    %465 = vmatpush1.bf16.msra.mxu0 %v407
    %466 = vmatprep.subr.bf16.mxu0 %v405
    %467 = vmatpush1.bf16.msra.mxu0 %v404
    %468 = vmatprep.subr.bf16.mxu0 0
    %469 = vmatpush2.bf16.msra.mxu0 0
    %470 = vmatprep.subr.bf16.mxu0 0
    %471 = vmatpush2.bf16.msra.mxu0 0
    %472 = vmatprep.subr.bf16.mxu0 0
    %473 = vmatpush2.bf16.msra.mxu0 0
    %474 = vmatprep.subr.bf16.mxu0 0
    %475 = vmatpush2.bf16.msra.mxu0 0
    %476 = vmatprep.subr.bf16.mxu0 0
    %477 = vmatpush2.bf16.msra.mxu0 0
    %478 = vmatprep.subr.bf16.mxu0 0
    %479 = vmatpush2.bf16.msra.mxu0 0
    %480 = vmatprep.subr.bf16.mxu0 0
    %481 = vmatpush2.bf16.msra.mxu0 0
    %482 = vmatprep.subr.bf16.mxu0 0
    %483 = vmatpush2.bf16.msra.mxu0 0
    %484 = vmatprep.mubr.bf16.mxu0 0
    %485 = vmatmul.mubr.bf16.gmra.mxu0 %v307
    %v486 = vpop.f32.mrf.mxu0
    %v487 = vadd.f32 %v312, %v486
    %v488 = vpop.f32.mrf.mxu0
    %v489 = vadd.f32 %v316, %v488
    %v490 = vpop.f32.mrf.mxu0
    %v491 = vadd.f32 %v312, %v490
    %v492 = vpop.f32.mrf.mxu0
    %v493 = vadd.f32 %v316, %v492
    %494 = vdwg.mxu0
    %495 = vmatprep.subr.bf16.mxu0 0
    %496 = vmatpush1.bf16.msra.mxu0 %v427
    %497 = vmatprep.subr.bf16.mxu0 0
    %498 = vmatpush1.bf16.msra.mxu0 %v424
    %499 = vmatprep.subr.bf16.mxu0 0
    %500 = vmatpush1.bf16.msra.mxu0 %v421
    %501 = vmatprep.subr.bf16.mxu0 0
    %502 = vmatpush1.bf16.msra.mxu0 %v418
    %503 = vmatprep.subr.bf16.mxu0 0
    %504 = vmatpush1.bf16.msra.mxu0 %v415
    %505 = vmatprep.subr.bf16.mxu0 0
    %506 = vmatpush1.bf16.msra.mxu0 %v412
    %507 = vmatprep.subr.bf16.mxu0 0
    %508 = vmatpush1.bf16.msra.mxu0 %v409
    %509 = vmatprep.subr.bf16.mxu0 0
    %510 = vmatpush1.bf16.msra.mxu0 %v406
    %511 = vmatprep.subr.bf16.mxu0 0
    %512 = vmatpush2.bf16.msra.mxu0 0
    %513 = vmatprep.subr.bf16.mxu0 0
    %514 = vmatpush2.bf16.msra.mxu0 0
    %515 = vmatprep.subr.bf16.mxu0 0
    %516 = vmatpush2.bf16.msra.mxu0 0
    %517 = vmatprep.subr.bf16.mxu0 0
    %518 = vmatpush2.bf16.msra.mxu0 0
    %519 = vmatprep.subr.bf16.mxu0 0
    %520 = vmatpush2.bf16.msra.mxu0 0
    %521 = vmatprep.subr.bf16.mxu0 0
    %522 = vmatpush2.bf16.msra.mxu0 0
    %523 = vmatprep.subr.bf16.mxu0 0
    %524 = vmatpush2.bf16.msra.mxu0 0
    %525 = vmatprep.subr.bf16.mxu0 0
    %526 = vmatpush2.bf16.msra.mxu0 0
    %527 = vmatprep.mubr.bf16.mxu0 0
    %528 = vmatmul.mubr.bf16.gmra.mxu0 %v307
    %v529 = vpop.f32.mrf.mxu0
    %v530 = vadd.f32 %v320, %v529
    %v531 = vpop.f32.mrf.mxu0
    %v532 = vpop.f32.mrf.mxu0
    %v533 = vadd.f32 %v320, %v532
    %v534 = vpop.f32.mrf.mxu0
    %535 = vdwg.mxu0
    %v536 = vpack.c.bf16 %v491, %v487
    %v537 = vpack.c.bf16 %v493, %v489
    %538 = vmatprep.subr.bf16.mxu0 0
    %539 = vmatpush1.bf16.xpose.msra.mxu0 0
    %540 = vmatprep.subr.bf16.mxu0 0
    %541 = vmatpush1.bf16.xpose.msra.mxu0 0
    %542 = vmatprep.subr.bf16.mxu0 0
    %543 = vmatpush1.bf16.xpose.msra.mxu0 0
    %544 = vmatprep.subr.bf16.mxu0 0
    %545 = vmatpush1.bf16.xpose.msra.mxu0 0
    %546 = vmatprep.subr.bf16.mxu0 0
    %547 = vmatpush1.bf16.xpose.msra.mxu0 0
    %548 = vmatprep.subr.bf16.mxu0 0
    %549 = vmatpush1.bf16.xpose.msra.mxu0 0
    %550 = vmatprep.subr.bf16.mxu0 0
    %551 = vmatpush1.bf16.xpose.msra.mxu0 0
    %552 = vmatprep.subr.bf16.mxu0 0
    %553 = vmatpush1.bf16.xpose.msra.mxu0 %v537
    %554 = vmatprep.subr.bf16.mxu0 0
    %555 = vmatpush2.bf16.xpose.msra.mxu0 0
    %556 = vmatprep.subr.bf16.mxu0 0
    %557 = vmatpush2.bf16.xpose.msra.mxu0 0
    %558 = vmatprep.subr.bf16.mxu0 0
    %559 = vmatpush2.bf16.xpose.msra.mxu0 0
    %560 = vmatprep.subr.bf16.mxu0 0
    %561 = vmatpush2.bf16.xpose.msra.mxu0 0
    %562 = vmatprep.subr.bf16.mxu0 0
    %563 = vmatpush2.bf16.xpose.msra.mxu0 0
    %564 = vmatprep.subr.bf16.mxu0 0
    %565 = vmatpush2.bf16.xpose.msra.mxu0 0
    %566 = vmatprep.subr.bf16.mxu0 0
    %567 = vmatpush2.bf16.xpose.msra.mxu0 0
    %568 = vmatprep.subr.bf16.mxu0 0
    %569 = vmatpush2.bf16.xpose.msra.mxu0 0
    %570 = vmatprep.mubr.bf16.mxu0 0
    %571 = vmatmul.mubr.bf16.gmra.mxu0 %v536
    %v572 = vpop.f32.mrf.mxu0
    %v573 = vadd.f32 0.0, %v572
    %v574 = vpop.f32.mrf.mxu0
    %v575 = vpop.f32.mrf.mxu0
    %v576 = vadd.f32 0.0, %v575
    %v577 = vpop.f32.mrf.mxu0
    %578 = vdwg.mxu0
    %v579 = vmul.f32 %v573, 0.088388346
    %v580 = vmul.f32 %v576, 0.088388346
    %v581 = vlaneseq
    %v582 = vand.u32 %v581, 127
    %v583 = vstv %s56
    %vm584 = vcmp.lt.s32.totalorder %v582, %v583
    %v585 = vsel %vm584, 1, 0
    %vm586 = vcmp.eq.s32.totalorder %v585, 1
    %v587 = vsel %vm586, %v579, -1e+30
    %v588 = vsel %vm586, %v580, -1e+30
    %vm589 = vcmask 130048
    %v590 = vsel %vm589, %v587, -inf
    %591 = vmax.xlane.f32.xlu0 %v590
    %v592 = vpop.xlane.xlu0 %591
    %v593 = vsel %vm589, %v588, -inf
    %594 = vmax.xlane.f32.xlu0 %v593
    %v595 = vpop.xlane.xlu0 %594
    %v596 = vsub.f32 %v587, %v592
    %v597 = vsub.f32 %v588, %v595
    %v598 = vmul.f32 %v596, 1.442695
    %v599 = vpow.pop %v598
    %v600 = vmul.f32 %v597, 1.442695
    %v601 = vpow.pop %v600
    %v602 = vsel %vm589, %v599, 0.0
    %603 = vadd.xlane.f32.xlu0 %v602
    %v604 = vpop.xlane.xlu0 %603
    %v605 = vsel %vm589, %v601, 0.0
    %606 = vadd.xlane.f32.xlu0 %v605
    %v607 = vpop.xlane.xlu0 %606
    %v608 = vrcp.pop %v604
    %v609 = vmul.f32 %v599, %v608
    %v610 = vrcp.pop %v607
    %v611 = vmul.f32 %v601, %v610
    %v612 = vpack.c.bf16 %v611, %v609
    %v613 = vpack.c.bf16 %v533, %v530
    %v614 = vlaneseq
    %v615 = vshrl.u32 %v614, 7
    %v616 = vsub.s32 0, %v615
    %v617 = vrot.slane %v62, %v616
    %v619 = vsel %vm589, %v612, 0
    %621 = vmatprep.subr.bf16.mxu0 0
    %622 = vmatpush1.bf16.msra.mxu0 0
    %623 = vmatprep.subr.bf16.mxu0 0
    %624 = vmatpush1.bf16.msra.mxu0 0
    %625 = vmatprep.subr.bf16.mxu0 0
    %626 = vmatpush1.bf16.msra.mxu0 0
    %627 = vmatprep.subr.bf16.mxu0 0
    %628 = vmatpush1.bf16.msra.mxu0 0
    %629 = vmatprep.subr.bf16.mxu0 0
    %630 = vmatpush1.bf16.msra.mxu0 0
    %631 = vmatprep.subr.bf16.mxu0 0
    %632 = vmatpush1.bf16.msra.mxu0 0
    %633 = vmatprep.subr.bf16.mxu0 0
    %634 = vmatpush1.bf16.msra.mxu0 0
    %635 = vmatprep.subr.bf16.mxu0 0
    %636 = vmatpush1.bf16.msra.mxu0 %v613
    %637 = vmatprep.subr.bf16.mxu0 0
    %638 = vmatpush2.bf16.msra.mxu0 0
    %639 = vmatprep.subr.bf16.mxu0 0
    %640 = vmatpush2.bf16.msra.mxu0 0
    %641 = vmatprep.subr.bf16.mxu0 0
    %642 = vmatpush2.bf16.msra.mxu0 0
    %643 = vmatprep.subr.bf16.mxu0 0
    %644 = vmatpush2.bf16.msra.mxu0 0
    %645 = vmatprep.subr.bf16.mxu0 0
    %646 = vmatpush2.bf16.msra.mxu0 0
    %647 = vmatprep.subr.bf16.mxu0 0
    %648 = vmatpush2.bf16.msra.mxu0 0
    %649 = vmatprep.subr.bf16.mxu0 0
    %650 = vmatpush2.bf16.msra.mxu0 0
    %651 = vmatprep.subr.bf16.mxu0 0
    %652 = vmatpush2.bf16.msra.mxu0 0
    %653 = vmatprep.mubr.bf16.mxu0 0
    %654 = vmatmul.mubr.bf16.gmra.mxu0 %v619
    %v655 = vpop.f32.mrf.mxu0
    %v656 = vadd.f32 %v617, %v655
    %v657 = vpop.f32.mrf.mxu0
    %v658 = vpop.f32.mrf.mxu0
    %v659 = vadd.f32 %v617, %v658
    %v660 = vpop.f32.mrf.mxu0
    %661 = vdwg.mxu0
    %v662 = vadd.f32 %v305, %v656
    %v663 = vadd.f32 %v306, %v659
    %664 = vadd.xlane.f32.xlu0 %v662
    %v665 = vpop.xlane.xlu0 %664
    %666 = vadd.xlane.f32.xlu0 %v663
    %v667 = vpop.xlane.xlu0 %666
    %v668 = vrcp.pop 128.0
    %v669 = vmul.f32 %v665, %v668
    %v670 = vmul.f32 %v667, %v668
    %v671 = vsub.f32 %v662, %v669
    %v672 = vsub.f32 %v663, %v670
    %v673 = vmul.f32 %v671, %v671
    %v674 = vmul.f32 %v672, %v672
    %675 = vadd.xlane.f32.xlu0 %v673
    %v676 = vpop.xlane.xlu0 %675
    %677 = vadd.xlane.f32.xlu0 %v674
    %v678 = vpop.xlane.xlu0 %677
    %v679 = vmul.f32 %v676, %v668
    %v680 = vmul.f32 %v678, %v668
    %v681 = vadd.f32 %v679, 1e-05
    %v682 = vadd.f32 %v680, 1e-05
    %v683 = vrsqrt.pop %v681
    %v684 = vrsqrt.pop %v682
    %v685 = vmul.f32 %v671, %v683
    %v686 = vmul.f32 %v672, %v684
    %v687 = vlaneseq
    %v688 = vshrl.u32 %v687, 7
    %v689 = vsub.s32 0, %v688
    %v690 = vrot.slane %v63, %v689
    %v691 = vmul.f32 %v685, %v690
    %v692 = vmul.f32 %v686, %v690
    %v693 = vlaneseq
    %v694 = vshrl.u32 %v693, 7
    %v695 = vsub.s32 0, %v694
    %v696 = vrot.slane %v64, %v695
    %v697 = vadd.f32 %v691, %v696
    %v698 = vadd.f32 %v692, %v696
    %v699 = vpack.c.bf16 %v698, %v697
    %v701 = vlaneseq
    %v702 = vshrl.u32 %v701, 7
    %v703 = vsub.s32 0, %v702
    %v704 = vrot.slane %v74, %v703
    %v705 = vlaneseq
    %v706 = vshrl.u32 %v705, 7
    %v707 = vsub.s32 1, %v706
    %v708 = vrot.slane %v74, %v707
    %v709 = vlaneseq
    %v710 = vshrl.u32 %v709, 7
    %v711 = vsub.s32 2, %v710
    %v712 = vrot.slane %v74, %v711
    %v713 = vlaneseq
    %v714 = vshrl.u32 %v713, 7
    %v715 = vsub.s32 3, %v714
    %v716 = vrot.slane %v74, %v715
    %v753 = vunpack.c.l.b16 %v107
    %v754 = vunpack.c.h.b16 %v107
    %v755 = vunpack.c.l.b16 %v108
    %v756 = vunpack.c.h.b16 %v108
    %v757 = vunpack.c.l.b16 %v109
    %v758 = vunpack.c.h.b16 %v109
    %v759 = vunpack.c.l.b16 %v110
    %v760 = vunpack.c.h.b16 %v110
    %v761 = vunpack.c.l.b16 %v111
    %v762 = vunpack.c.h.b16 %v111
    %v763 = vunpack.c.l.b16 %v112
    %v764 = vunpack.c.h.b16 %v112
    %v765 = vunpack.c.l.b16 %v113
    %v766 = vunpack.c.h.b16 %v113
    %v767 = vunpack.c.l.b16 %v114
    %v768 = vunpack.c.h.b16 %v114
    %v769 = vunpack.c.l.b16 %v115
    %v770 = vunpack.c.h.b16 %v115
    %v771 = vunpack.c.l.b16 %v116
    %v772 = vunpack.c.h.b16 %v116
    %v773 = vunpack.c.l.b16 %v117
    %v774 = vunpack.c.h.b16 %v117
    %v775 = vunpack.c.l.b16 %v118
    %v776 = vunpack.c.h.b16 %v118
    %v777 = vunpack.c.l.b16 %v119
    %v778 = vunpack.c.h.b16 %v119
    %v779 = vunpack.c.l.b16 %v120
    %v780 = vunpack.c.h.b16 %v120
    %v781 = vunpack.c.l.b16 %v121
    %v782 = vunpack.c.h.b16 %v121
    %v783 = vunpack.c.l.b16 %v122
    %v784 = vunpack.c.h.b16 %v122
    %v785 = vunpack.c.l.b16 %v123
    %v786 = vunpack.c.h.b16 %v123
    %v787 = vunpack.c.l.b16 %v124
    %v788 = vunpack.c.h.b16 %v124
    %v789 = vunpack.c.l.b16 %v125
    %v790 = vunpack.c.h.b16 %v125
    %v791 = vunpack.c.l.b16 %v126
    %v792 = vunpack.c.h.b16 %v126
    %v793 = vunpack.c.l.b16 %v127
    %v794 = vunpack.c.h.b16 %v127
    %v795 = vunpack.c.l.b16 %v128
    %v796 = vunpack.c.h.b16 %v128
    %v797 = vunpack.c.l.b16 %v129
    %v798 = vunpack.c.h.b16 %v129
    %v799 = vunpack.c.l.b16 %v130
    %v800 = vunpack.c.h.b16 %v130
    %v801 = vunpack.c.l.b16 %v131
    %v802 = vunpack.c.h.b16 %v131
    %v803 = vunpack.c.l.b16 %v132
    %v804 = vunpack.c.h.b16 %v132
    %v805 = vunpack.c.l.b16 %v133
    %v806 = vunpack.c.h.b16 %v133
    %v807 = vunpack.c.l.b16 %v134
    %v808 = vunpack.c.h.b16 %v134
    %v809 = vunpack.c.l.b16 %v135
    %v810 = vunpack.c.h.b16 %v135
    %v811 = vunpack.c.l.b16 %v136
    %v812 = vunpack.c.h.b16 %v136
    %v813 = vunpack.c.l.b16 %v137
    %v814 = vunpack.c.h.b16 %v137
    %v815 = vunpack.c.l.b16 %v138
    %v816 = vunpack.c.h.b16 %v138
    %v817 = vpack.c.b16 %v757, %v753
    %v818 = vpack.c.b16 %v758, %v754
    %v819 = vpack.c.b16 %v759, %v755
    %v820 = vpack.c.b16 %v760, %v756
    %v821 = vpack.c.b16 %v765, %v761
    %v822 = vpack.c.b16 %v766, %v762
    %v823 = vpack.c.b16 %v767, %v763
    %v824 = vpack.c.b16 %v768, %v764
    %v825 = vpack.c.b16 %v773, %v769
    %v826 = vpack.c.b16 %v774, %v770
    %v827 = vpack.c.b16 %v775, %v771
    %v828 = vpack.c.b16 %v776, %v772
    %v829 = vpack.c.b16 %v781, %v777
    %v830 = vpack.c.b16 %v782, %v778
    %v831 = vpack.c.b16 %v783, %v779
    %v832 = vpack.c.b16 %v784, %v780
    %v833 = vpack.c.b16 %v789, %v785
    %v834 = vpack.c.b16 %v790, %v786
    %v835 = vpack.c.b16 %v791, %v787
    %v836 = vpack.c.b16 %v792, %v788
    %v837 = vpack.c.b16 %v797, %v793
    %v838 = vpack.c.b16 %v798, %v794
    %v839 = vpack.c.b16 %v799, %v795
    %v840 = vpack.c.b16 %v800, %v796
    %v841 = vpack.c.b16 %v805, %v801
    %v842 = vpack.c.b16 %v806, %v802
    %v843 = vpack.c.b16 %v807, %v803
    %v844 = vpack.c.b16 %v808, %v804
    %v845 = vpack.c.b16 %v813, %v809
    %v846 = vpack.c.b16 %v814, %v810
    %v847 = vpack.c.b16 %v815, %v811
    %v848 = vpack.c.b16 %v816, %v812
    %881 = vmatprep.subr.bf16.mxu0 %v846
    %882 = vmatpush1.bf16.msra.mxu0 %v845
    %883 = vmatprep.subr.bf16.mxu0 %v842
    %884 = vmatpush1.bf16.msra.mxu0 %v841
    %885 = vmatprep.subr.bf16.mxu0 %v838
    %886 = vmatpush1.bf16.msra.mxu0 %v837
    %887 = vmatprep.subr.bf16.mxu0 %v834
    %888 = vmatpush1.bf16.msra.mxu0 %v833
    %889 = vmatprep.subr.bf16.mxu0 %v830
    %890 = vmatpush1.bf16.msra.mxu0 %v829
    %891 = vmatprep.subr.bf16.mxu0 %v826
    %892 = vmatpush1.bf16.msra.mxu0 %v825
    %893 = vmatprep.subr.bf16.mxu0 %v822
    %894 = vmatpush1.bf16.msra.mxu0 %v821
    %895 = vmatprep.subr.bf16.mxu0 %v818
    %896 = vmatpush1.bf16.msra.mxu0 %v817
    %897 = vmatprep.subr.bf16.mxu0 0
    %898 = vmatpush2.bf16.msra.mxu0 0
    %899 = vmatprep.subr.bf16.mxu0 0
    %900 = vmatpush2.bf16.msra.mxu0 0
    %901 = vmatprep.subr.bf16.mxu0 0
    %902 = vmatpush2.bf16.msra.mxu0 0
    %903 = vmatprep.subr.bf16.mxu0 0
    %904 = vmatpush2.bf16.msra.mxu0 0
    %905 = vmatprep.subr.bf16.mxu0 0
    %906 = vmatpush2.bf16.msra.mxu0 0
    %907 = vmatprep.subr.bf16.mxu0 0
    %908 = vmatpush2.bf16.msra.mxu0 0
    %909 = vmatprep.subr.bf16.mxu0 0
    %910 = vmatpush2.bf16.msra.mxu0 0
    %911 = vmatprep.subr.bf16.mxu0 0
    %912 = vmatpush2.bf16.msra.mxu0 0
    %913 = vmatprep.mubr.bf16.mxu0 0
    %914 = vmatmul.mubr.bf16.gmra.mxu0 %v699
    %v915 = vpop.f32.mrf.mxu0
    %v916 = vadd.f32 %v704, %v915
    %v917 = vpop.f32.mrf.mxu0
    %v918 = vadd.f32 %v708, %v917
    %v919 = vpop.f32.mrf.mxu0
    %v920 = vadd.f32 %v704, %v919
    %v921 = vpop.f32.mrf.mxu0
    %v922 = vadd.f32 %v708, %v921
    %923 = vdwg.mxu0
    %924 = vmatprep.subr.bf16.mxu0 %v848
    %925 = vmatpush1.bf16.msra.mxu0 %v847
    %926 = vmatprep.subr.bf16.mxu0 %v844
    %927 = vmatpush1.bf16.msra.mxu0 %v843
    %928 = vmatprep.subr.bf16.mxu0 %v840
    %929 = vmatpush1.bf16.msra.mxu0 %v839
    %930 = vmatprep.subr.bf16.mxu0 %v836
    %931 = vmatpush1.bf16.msra.mxu0 %v835
    %932 = vmatprep.subr.bf16.mxu0 %v832
    %933 = vmatpush1.bf16.msra.mxu0 %v831
    %934 = vmatprep.subr.bf16.mxu0 %v828
    %935 = vmatpush1.bf16.msra.mxu0 %v827
    %936 = vmatprep.subr.bf16.mxu0 %v824
    %937 = vmatpush1.bf16.msra.mxu0 %v823
    %938 = vmatprep.subr.bf16.mxu0 %v820
    %939 = vmatpush1.bf16.msra.mxu0 %v819
    %940 = vmatprep.subr.bf16.mxu0 0
    %941 = vmatpush2.bf16.msra.mxu0 0
    %942 = vmatprep.subr.bf16.mxu0 0
    %943 = vmatpush2.bf16.msra.mxu0 0
    %944 = vmatprep.subr.bf16.mxu0 0
    %945 = vmatpush2.bf16.msra.mxu0 0
    %946 = vmatprep.subr.bf16.mxu0 0
    %947 = vmatpush2.bf16.msra.mxu0 0
    %948 = vmatprep.subr.bf16.mxu0 0
    %949 = vmatpush2.bf16.msra.mxu0 0
    %950 = vmatprep.subr.bf16.mxu0 0
    %951 = vmatpush2.bf16.msra.mxu0 0
    %952 = vmatprep.subr.bf16.mxu0 0
    %953 = vmatpush2.bf16.msra.mxu0 0
    %954 = vmatprep.subr.bf16.mxu0 0
    %955 = vmatpush2.bf16.msra.mxu0 0
    %956 = vmatprep.mubr.bf16.mxu0 0
    %957 = vmatmul.mubr.bf16.gmra.mxu0 %v699
    %v958 = vpop.f32.mrf.mxu0
    %v959 = vadd.f32 %v712, %v958
    %v960 = vpop.f32.mrf.mxu0
    %v961 = vadd.f32 %v716, %v960
    %v962 = vpop.f32.mrf.mxu0
    %v963 = vadd.f32 %v712, %v962
    %v964 = vpop.f32.mrf.mxu0
    %v965 = vadd.f32 %v716, %v964
    %966 = vdwg.mxu0
    %v967 = vmul.f32 %v916, 0.5
    %v968 = vmul.f32 %v918, 0.5
    %v969 = vmul.f32 %v959, 0.5
    %v970 = vmul.f32 %v961, 0.5
    %v971 = vmul.f32 %v920, 0.5
    %v972 = vmul.f32 %v922, 0.5
    %v973 = vmul.f32 %v963, 0.5
    %v974 = vmul.f32 %v965, 0.5
    %v975 = vmul.f32 %v916, 0.044715
    %v976 = vmul.f32 %v918, 0.044715
    %v977 = vmul.f32 %v959, 0.044715
    %v978 = vmul.f32 %v961, 0.044715
    %v979 = vmul.f32 %v920, 0.044715
    %v980 = vmul.f32 %v922, 0.044715
    %v981 = vmul.f32 %v963, 0.044715
    %v982 = vmul.f32 %v965, 0.044715
    %v983 = vmul.f32 %v975, %v916
    %v984 = vmul.f32 %v976, %v918
    %v985 = vmul.f32 %v977, %v959
    %v986 = vmul.f32 %v978, %v961
    %v987 = vmul.f32 %v979, %v920
    %v988 = vmul.f32 %v980, %v922
    %v989 = vmul.f32 %v981, %v963
    %v990 = vmul.f32 %v982, %v965
    %v991 = vmul.f32 %v983, %v916
    %v992 = vmul.f32 %v984, %v918
    %v993 = vmul.f32 %v985, %v959
    %v994 = vmul.f32 %v986, %v961
    %v995 = vmul.f32 %v987, %v920
    %v996 = vmul.f32 %v988, %v922
    %v997 = vmul.f32 %v989, %v963
    %v998 = vmul.f32 %v990, %v965
    %v999 = vadd.f32 %v916, %v991
    %v1000 = vadd.f32 %v918, %v992
    %v1001 = vadd.f32 %v959, %v993
    %v1002 = vadd.f32 %v961, %v994
    %v1003 = vadd.f32 %v920, %v995
    %v1004 = vadd.f32 %v922, %v996
    %v1005 = vadd.f32 %v963, %v997
    %v1006 = vadd.f32 %v965, %v998
    %v1007 = vmul.f32 %v999, 0.7978846
    %v1008 = vmul.f32 %v1000, 0.7978846
    %v1009 = vmul.f32 %v1001, 0.7978846
    %v1010 = vmul.f32 %v1002, 0.7978846
    %v1011 = vmul.f32 %v1003, 0.7978846
    %v1012 = vmul.f32 %v1004, 0.7978846
    %v1013 = vmul.f32 %v1005, 0.7978846
    %v1014 = vmul.f32 %v1006, 0.7978846
    %v1015 = vtanh.pop %v1007
    %v1016 = vtanh.pop %v1008
    %v1017 = vtanh.pop %v1009
    %v1018 = vtanh.pop %v1010
    %v1019 = vtanh.pop %v1011
    %v1020 = vtanh.pop %v1012
    %v1021 = vtanh.pop %v1013
    %v1022 = vtanh.pop %v1014
    %v1023 = vadd.f32 %v1015, 1.0
    %v1024 = vadd.f32 %v1016, 1.0
    %v1025 = vadd.f32 %v1017, 1.0
    %v1026 = vadd.f32 %v1018, 1.0
    %v1027 = vadd.f32 %v1019, 1.0
    %v1028 = vadd.f32 %v1020, 1.0
    %v1029 = vadd.f32 %v1021, 1.0
    %v1030 = vadd.f32 %v1022, 1.0
    %v1031 = vmul.f32 %v967, %v1023
    %v1032 = vmul.f32 %v968, %v1024
    %v1033 = vmul.f32 %v969, %v1025
    %v1034 = vmul.f32 %v970, %v1026
    %v1035 = vmul.f32 %v971, %v1027
    %v1036 = vmul.f32 %v972, %v1028
    %v1037 = vmul.f32 %v973, %v1029
    %v1038 = vmul.f32 %v974, %v1030
    %v1039 = vpack.c.bf16 %v1035, %v1031
    %v1040 = vpack.c.bf16 %v1036, %v1032
    %v1041 = vpack.c.bf16 %v1037, %v1033
    %v1042 = vpack.c.bf16 %v1038, %v1034
    %v1043 = vlaneseq
    %v1044 = vshrl.u32 %v1043, 7
    %v1045 = vsub.s32 0, %v1044
    %v1046 = vrot.slane %v65, %v1045
    %v1111 = vunpack.c.l.b16 %v203
    %v1112 = vunpack.c.l.b16 %v204
    %v1113 = vunpack.c.l.b16 %v205
    %v1114 = vunpack.c.l.b16 %v206
    %v1115 = vunpack.c.l.b16 %v207
    %v1116 = vunpack.c.l.b16 %v208
    %v1117 = vunpack.c.l.b16 %v209
    %v1118 = vunpack.c.l.b16 %v210
    %v1119 = vunpack.c.l.b16 %v211
    %v1120 = vunpack.c.l.b16 %v212
    %v1121 = vunpack.c.l.b16 %v213
    %v1122 = vunpack.c.l.b16 %v214
    %v1123 = vunpack.c.l.b16 %v215
    %v1124 = vunpack.c.l.b16 %v216
    %v1125 = vunpack.c.l.b16 %v217
    %v1126 = vunpack.c.l.b16 %v218
    %v1127 = vunpack.c.l.b16 %v219
    %v1128 = vunpack.c.l.b16 %v220
    %v1129 = vunpack.c.l.b16 %v221
    %v1130 = vunpack.c.l.b16 %v222
    %v1131 = vunpack.c.l.b16 %v223
    %v1132 = vunpack.c.l.b16 %v224
    %v1133 = vunpack.c.l.b16 %v225
    %v1134 = vunpack.c.l.b16 %v226
    %v1135 = vunpack.c.l.b16 %v227
    %v1136 = vunpack.c.l.b16 %v228
    %v1137 = vunpack.c.l.b16 %v229
    %v1138 = vunpack.c.l.b16 %v230
    %v1139 = vunpack.c.l.b16 %v231
    %v1140 = vunpack.c.l.b16 %v232
    %v1141 = vunpack.c.l.b16 %v233
    %v1142 = vunpack.c.l.b16 %v234
    %v1143 = vunpack.c.l.b16 %v235
    %v1144 = vunpack.c.l.b16 %v236
    %v1145 = vunpack.c.l.b16 %v237
    %v1146 = vunpack.c.l.b16 %v238
    %v1147 = vunpack.c.l.b16 %v239
    %v1148 = vunpack.c.l.b16 %v240
    %v1149 = vunpack.c.l.b16 %v241
    %v1150 = vunpack.c.l.b16 %v242
    %v1151 = vunpack.c.l.b16 %v243
    %v1152 = vunpack.c.l.b16 %v244
    %v1153 = vunpack.c.l.b16 %v245
    %v1154 = vunpack.c.l.b16 %v246
    %v1155 = vunpack.c.l.b16 %v247
    %v1156 = vunpack.c.l.b16 %v248
    %v1157 = vunpack.c.l.b16 %v249
    %v1158 = vunpack.c.l.b16 %v250
    %v1159 = vunpack.c.l.b16 %v251
    %v1160 = vunpack.c.l.b16 %v252
    %v1161 = vunpack.c.l.b16 %v253
    %v1162 = vunpack.c.l.b16 %v254
    %v1163 = vunpack.c.l.b16 %v255
    %v1164 = vunpack.c.l.b16 %v256
    %v1165 = vunpack.c.l.b16 %v257
    %v1166 = vunpack.c.l.b16 %v258
    %v1167 = vunpack.c.l.b16 %v259
    %v1168 = vunpack.c.l.b16 %v260
    %v1169 = vunpack.c.l.b16 %v261
    %v1170 = vunpack.c.l.b16 %v262
    %v1171 = vunpack.c.l.b16 %v263
    %v1172 = vunpack.c.l.b16 %v264
    %v1173 = vunpack.c.l.b16 %v265
    %v1174 = vunpack.c.l.b16 %v266
    %v1175 = vpack.c.b16 %v1112, %v1111
    %v1176 = vpack.c.b16 %v1114, %v1113
    %v1177 = vpack.c.b16 %v1116, %v1115
    %v1178 = vpack.c.b16 %v1118, %v1117
    %v1179 = vpack.c.b16 %v1120, %v1119
    %v1180 = vpack.c.b16 %v1122, %v1121
    %v1181 = vpack.c.b16 %v1124, %v1123
    %v1182 = vpack.c.b16 %v1126, %v1125
    %v1183 = vpack.c.b16 %v1128, %v1127
    %v1184 = vpack.c.b16 %v1130, %v1129
    %v1185 = vpack.c.b16 %v1132, %v1131
    %v1186 = vpack.c.b16 %v1134, %v1133
    %v1187 = vpack.c.b16 %v1136, %v1135
    %v1188 = vpack.c.b16 %v1138, %v1137
    %v1189 = vpack.c.b16 %v1140, %v1139
    %v1190 = vpack.c.b16 %v1142, %v1141
    %v1191 = vpack.c.b16 %v1144, %v1143
    %v1192 = vpack.c.b16 %v1146, %v1145
    %v1193 = vpack.c.b16 %v1148, %v1147
    %v1194 = vpack.c.b16 %v1150, %v1149
    %v1195 = vpack.c.b16 %v1152, %v1151
    %v1196 = vpack.c.b16 %v1154, %v1153
    %v1197 = vpack.c.b16 %v1156, %v1155
    %v1198 = vpack.c.b16 %v1158, %v1157
    %v1199 = vpack.c.b16 %v1160, %v1159
    %v1200 = vpack.c.b16 %v1162, %v1161
    %v1201 = vpack.c.b16 %v1164, %v1163
    %v1202 = vpack.c.b16 %v1166, %v1165
    %v1203 = vpack.c.b16 %v1168, %v1167
    %v1204 = vpack.c.b16 %v1170, %v1169
    %v1205 = vpack.c.b16 %v1172, %v1171
    %v1206 = vpack.c.b16 %v1174, %v1173
    %1239 = vmatprep.subr.bf16.mxu0 0
    %1240 = vmatpush1.bf16.msra.mxu0 %v1182
    %1241 = vmatprep.subr.bf16.mxu0 0
    %1242 = vmatpush1.bf16.msra.mxu0 %v1181
    %1243 = vmatprep.subr.bf16.mxu0 0
    %1244 = vmatpush1.bf16.msra.mxu0 %v1180
    %1245 = vmatprep.subr.bf16.mxu0 0
    %1246 = vmatpush1.bf16.msra.mxu0 %v1179
    %1247 = vmatprep.subr.bf16.mxu0 0
    %1248 = vmatpush1.bf16.msra.mxu0 %v1178
    %1249 = vmatprep.subr.bf16.mxu0 0
    %1250 = vmatpush1.bf16.msra.mxu0 %v1177
    %1251 = vmatprep.subr.bf16.mxu0 0
    %1252 = vmatpush1.bf16.msra.mxu0 %v1176
    %1253 = vmatprep.subr.bf16.mxu0 0
    %1254 = vmatpush1.bf16.msra.mxu0 %v1175
    %1255 = vmatprep.subr.bf16.mxu0 0
    %1256 = vmatpush2.bf16.msra.mxu0 %v1190
    %1257 = vmatprep.subr.bf16.mxu0 0
    %1258 = vmatpush2.bf16.msra.mxu0 %v1189
    %1259 = vmatprep.subr.bf16.mxu0 0
    %1260 = vmatpush2.bf16.msra.mxu0 %v1188
    %1261 = vmatprep.subr.bf16.mxu0 0
    %1262 = vmatpush2.bf16.msra.mxu0 %v1187
    %1263 = vmatprep.subr.bf16.mxu0 0
    %1264 = vmatpush2.bf16.msra.mxu0 %v1186
    %1265 = vmatprep.subr.bf16.mxu0 0
    %1266 = vmatpush2.bf16.msra.mxu0 %v1185
    %1267 = vmatprep.subr.bf16.mxu0 0
    %1268 = vmatpush2.bf16.msra.mxu0 %v1184
    %1269 = vmatprep.subr.bf16.mxu0 0
    %1270 = vmatpush2.bf16.msra.mxu0 %v1183
    %1271 = vmatprep.mubr.bf16.mxu0 %v1040
    %1272 = vmatmul.mubr.bf16.gmra.mxu0 %v1039
    %v1273 = vpop.f32.mrf.mxu0
    %v1274 = vadd.f32 %v1046, %v1273
    %v1275 = vpop.f32.mrf.mxu0
    %v1276 = vpop.f32.mrf.mxu0
    %v1277 = vadd.f32 %v1046, %v1276
    %v1278 = vpop.f32.mrf.mxu0
    %1279 = vdwg.mxu0
    %1280 = vmatprep.subr.bf16.mxu0 0
    %1281 = vmatpush1.bf16.msra.mxu0 %v1198
    %1282 = vmatprep.subr.bf16.mxu0 0
    %1283 = vmatpush1.bf16.msra.mxu0 %v1197
    %1284 = vmatprep.subr.bf16.mxu0 0
    %1285 = vmatpush1.bf16.msra.mxu0 %v1196
    %1286 = vmatprep.subr.bf16.mxu0 0
    %1287 = vmatpush1.bf16.msra.mxu0 %v1195
    %1288 = vmatprep.subr.bf16.mxu0 0
    %1289 = vmatpush1.bf16.msra.mxu0 %v1194
    %1290 = vmatprep.subr.bf16.mxu0 0
    %1291 = vmatpush1.bf16.msra.mxu0 %v1193
    %1292 = vmatprep.subr.bf16.mxu0 0
    %1293 = vmatpush1.bf16.msra.mxu0 %v1192
    %1294 = vmatprep.subr.bf16.mxu0 0
    %1295 = vmatpush1.bf16.msra.mxu0 %v1191
    %1296 = vmatprep.subr.bf16.mxu0 0
    %1297 = vmatpush2.bf16.msra.mxu0 %v1206
    %1298 = vmatprep.subr.bf16.mxu0 0
    %1299 = vmatpush2.bf16.msra.mxu0 %v1205
    %1300 = vmatprep.subr.bf16.mxu0 0
    %1301 = vmatpush2.bf16.msra.mxu0 %v1204
    %1302 = vmatprep.subr.bf16.mxu0 0
    %1303 = vmatpush2.bf16.msra.mxu0 %v1203
    %1304 = vmatprep.subr.bf16.mxu0 0
    %1305 = vmatpush2.bf16.msra.mxu0 %v1202
    %1306 = vmatprep.subr.bf16.mxu0 0
    %1307 = vmatpush2.bf16.msra.mxu0 %v1201
    %1308 = vmatprep.subr.bf16.mxu0 0
    %1309 = vmatpush2.bf16.msra.mxu0 %v1200
    %1310 = vmatprep.subr.bf16.mxu0 0
    %1311 = vmatpush2.bf16.msra.mxu0 %v1199
    %1312 = vmatprep.mubr.bf16.mxu0 %v1042
    %1313 = vmatmul.mubr.bf16.gmra.mxu0 %v1041
    %v1314 = vpop.f32.mrf.mxu0
    %v1315 = vadd.f32 %v1274, %v1314
    %v1316 = vpop.f32.mrf.mxu0
    %v1317 = vpop.f32.mrf.mxu0
    %v1318 = vadd.f32 %v1277, %v1317
    %v1319 = vpop.f32.mrf.mxu0
    %1320 = vdwg.mxu0
    %v1321 = vadd.f32 %v697, %v1315
    %v1322 = vadd.f32 %v698, %v1318
    %1323 = vadd.xlane.f32.xlu0 %v1321
    %v1324 = vpop.xlane.xlu0 %1323
    %1325 = vadd.xlane.f32.xlu0 %v1322
    %v1326 = vpop.xlane.xlu0 %1325
    %v1327 = vmul.f32 %v1324, %v668
    %v1328 = vmul.f32 %v1326, %v668
    %v1329 = vsub.f32 %v1321, %v1327
    %v1330 = vsub.f32 %v1322, %v1328
    %v1331 = vmul.f32 %v1329, %v1329
    %v1332 = vmul.f32 %v1330, %v1330
    %1333 = vadd.xlane.f32.xlu0 %v1331
    %v1334 = vpop.xlane.xlu0 %1333
    %1335 = vadd.xlane.f32.xlu0 %v1332
    %v1336 = vpop.xlane.xlu0 %1335
    %v1337 = vmul.f32 %v1334, %v668
    %v1338 = vmul.f32 %v1336, %v668
    %v1339 = vadd.f32 %v1337, 1e-05
    %v1340 = vadd.f32 %v1338, 1e-05
    %v1341 = vrsqrt.pop %v1339
    %v1342 = vrsqrt.pop %v1340
    %v1343 = vmul.f32 %v1329, %v1341
    %v1344 = vmul.f32 %v1330, %v1342
    %v1345 = vlaneseq
    %v1346 = vshrl.u32 %v1345, 7
    %v1347 = vsub.s32 0, %v1346
    %v1348 = vrot.slane %v66, %v1347
    %v1349 = vmul.f32 %v1343, %v1348
    %v1350 = vmul.f32 %v1344, %v1348
    %v1351 = vlaneseq
    %v1352 = vshrl.u32 %v1351, 7
    %v1353 = vsub.s32 0, %v1352
    %v1354 = vrot.slane %v67, %v1353
    %v1355 = vadd.f32 %v1349, %v1354
    %v1356 = vadd.f32 %v1350, %v1354
    %v1357 = vcvt.s32.f32 %v585
    %v1359 = vsel %vm589, %v1357, 0
    %1361 = vmatprep.subr.mxu0 0.0
    %1362 = vmatpush1.msra.mxu0 0.0
    %1363 = vmatprep.subr.mxu0 0.0
    %1364 = vmatpush1.msra.mxu0 0.0
    %1365 = vmatprep.subr.mxu0 0.0
    %1366 = vmatpush1.msra.mxu0 0.0
    %1367 = vmatprep.subr.mxu0 0.0
    %1368 = vmatpush1.msra.mxu0 0.0
    %1369 = vmatprep.subr.mxu0 0.0
    %1370 = vmatpush1.msra.mxu0 0.0
    %1371 = vmatprep.subr.mxu0 0.0
    %1372 = vmatpush1.msra.mxu0 0.0
    %1373 = vmatprep.subr.mxu0 0.0
    %1374 = vmatpush1.msra.mxu0 0.0
    %1375 = vmatprep.subr.mxu0 0.0
    %1376 = vmatpush1.msra.mxu0 0.0
    %1377 = vmatprep.subr.mxu0 0.0
    %1378 = vmatpush1.msra.mxu0 0.0
    %1379 = vmatprep.subr.mxu0 0.0
    %1380 = vmatpush1.msra.mxu0 0.0
    %1381 = vmatprep.subr.mxu0 0.0
    %1382 = vmatpush1.msra.mxu0 0.0
    %1383 = vmatprep.subr.mxu0 0.0
    %1384 = vmatpush1.msra.mxu0 0.0
    %1385 = vmatprep.subr.mxu0 0.0
    %1386 = vmatpush1.msra.mxu0 0.0
    %1387 = vmatprep.subr.mxu0 0.0
    %1388 = vmatpush1.msra.mxu0 0.0
    %1389 = vmatprep.subr.mxu0 0.0
    %1390 = vmatpush1.msra.mxu0 %v1356
    %1391 = vmatprep.subr.mxu0 0.0
    %1392 = vmatpush1.msra.mxu0 %v1355
    %1393 = vmatprep.subr.mxu0 0.0
    %1394 = vmatpush2.msra.mxu0 0.0
    %1395 = vmatprep.subr.mxu0 0.0
    %1396 = vmatpush2.msra.mxu0 0.0
    %1397 = vmatprep.subr.mxu0 0.0
    %1398 = vmatpush2.msra.mxu0 0.0
    %1399 = vmatprep.subr.mxu0 0.0
    %1400 = vmatpush2.msra.mxu0 0.0
    %1401 = vmatprep.subr.mxu0 0.0
    %1402 = vmatpush2.msra.mxu0 0.0
    %1403 = vmatprep.subr.mxu0 0.0
    %1404 = vmatpush2.msra.mxu0 0.0
    %1405 = vmatprep.subr.mxu0 0.0
    %1406 = vmatpush2.msra.mxu0 0.0
    %1407 = vmatprep.subr.mxu0 0.0
    %1408 = vmatpush2.msra.mxu0 0.0
    %1409 = vmatprep.subr.mxu0 0.0
    %1410 = vmatpush2.msra.mxu0 0.0
    %1411 = vmatprep.subr.mxu0 0.0
    %1412 = vmatpush2.msra.mxu0 0.0
    %1413 = vmatprep.subr.mxu0 0.0
    %1414 = vmatpush2.msra.mxu0 0.0
    %1415 = vmatprep.subr.mxu0 0.0
    %1416 = vmatpush2.msra.mxu0 0.0
    %1417 = vmatprep.subr.mxu0 0.0
    %1418 = vmatpush2.msra.mxu0 0.0
    %1419 = vmatprep.subr.mxu0 0.0
    %1420 = vmatpush2.msra.mxu0 0.0
    %1421 = vmatprep.subr.mxu0 0.0
    %1422 = vmatpush2.msra.mxu0 0.0
    %1423 = vmatprep.subr.mxu0 0.0
    %1424 = vmatpush2.msra.mxu0 0.0
    %1425 = vmatprep.mubr.f32.mxu0 0.0
    %1426 = vmatmul.mubr.f32.gmra.mxu0 %v1359
    %v1427 = vpop.f32.mrf.mxu0
    %v1428 = vadd.f32 0.0, %v1427
    %v1429 = vpop.f32.mrf.mxu0
    %1430 = vdwg.mxu0
    %p1431 = scmp.gt.s32.totalorder %s56, 1
    %s1432 = scalar_select %p1431, %s56, 1
    %s1433 = scvt.s32.f32 %s1432
    %v1434 = vstv %s1433
    %v1435 = vrcp.pop %v1434
    %s1436 = vtos %v1435
    %v1437 = vstv %s1436
    %v1438 = vmul.f32 %v1428, %v1437
    %v1439 = vld [vmem:[%s2] sm:$0xff]
    %1441 = vset.pattern.permute.xlu0 0
    %1442 = vperm.xlu0 %1441, %v1439
    %v1443 = vpop.permute.xlu0 %1442
    %v1445 = vlaneseq
    %v1446 = vshrl.u32 %v1445, 7
    %v1447 = vsub.s32 0, %v1446
    %v1448 = vrot.slane %v59, %v1447
    %v1449 = vmul.f32 %v1443, %v1448
    %1450 = vset.pattern.permute.xlu0 1
    %1451 = vperm.xlu0 %1450, %v1439
    %v1452 = vpop.permute.xlu0 %1451
    %v1454 = vlaneseq
    %v1455 = vshrl.u32 %v1454, 7
    %v1456 = vsub.s32 0, %v1455
    %v1457 = vrot.slane %v60, %v1456
    %v1458 = vmul.f32 %v1452, %v1457
    %v1459 = vadd.f32 %v1449, %v1458
    %v1460 = vlaneseq
    %v1461 = vshrl.u32 %v1460, 7
    %v1462 = vsub.s32 0, %v1461
    %v1463 = vrot.slane %v68, %v1462
    %v1464 = vadd.f32 %v1459, %v1463
    %v1465 = vmul.f32 %v1464, 0.5
    %v1466 = vmul.f32 %v1464, 0.044715
    %v1467 = vmul.f32 %v1466, %v1464
    %v1468 = vmul.f32 %v1467, %v1464
    %v1469 = vadd.f32 %v1464, %v1468
    %v1470 = vmul.f32 %v1469, 0.7978846
    %v1471 = vtanh.pop %v1470
    %v1472 = vadd.f32 %v1471, 1.0
    %v1473 = vmul.f32 %v1465, %v1472
    %v1474 = vpack.c.bf16 %v1438, %v1438
    %v1491 = vunpack.c.l.b16 %v139
    %v1492 = vunpack.c.l.b16 %v140
    %v1493 = vunpack.c.l.b16 %v141
    %v1494 = vunpack.c.l.b16 %v142
    %v1495 = vunpack.c.l.b16 %v143
    %v1496 = vunpack.c.l.b16 %v144
    %v1497 = vunpack.c.l.b16 %v145
    %v1498 = vunpack.c.l.b16 %v146
    %v1499 = vunpack.c.l.b16 %v147
    %v1500 = vunpack.c.l.b16 %v148
    %v1501 = vunpack.c.l.b16 %v149
    %v1502 = vunpack.c.l.b16 %v150
    %v1503 = vunpack.c.l.b16 %v151
    %v1504 = vunpack.c.l.b16 %v152
    %v1505 = vunpack.c.l.b16 %v153
    %v1506 = vunpack.c.l.b16 %v154
    %v1507 = vpack.c.b16 %v1492, %v1491
    %v1508 = vpack.c.b16 %v1494, %v1493
    %v1509 = vpack.c.b16 %v1496, %v1495
    %v1510 = vpack.c.b16 %v1498, %v1497
    %v1511 = vpack.c.b16 %v1500, %v1499
    %v1512 = vpack.c.b16 %v1502, %v1501
    %v1513 = vpack.c.b16 %v1504, %v1503
    %v1514 = vpack.c.b16 %v1506, %v1505
    %1523 = vmatprep.subr.bf16.mxu0 0
    %1524 = vmatpush1.bf16.msra.mxu0 %v1514
    %1525 = vmatprep.subr.bf16.mxu0 0
    %1526 = vmatpush1.bf16.msra.mxu0 %v1513
    %1527 = vmatprep.subr.bf16.mxu0 0
    %1528 = vmatpush1.bf16.msra.mxu0 %v1512
    %1529 = vmatprep.subr.bf16.mxu0 0
    %1530 = vmatpush1.bf16.msra.mxu0 %v1511
    %1531 = vmatprep.subr.bf16.mxu0 0
    %1532 = vmatpush1.bf16.msra.mxu0 %v1510
    %1533 = vmatprep.subr.bf16.mxu0 0
    %1534 = vmatpush1.bf16.msra.mxu0 %v1509
    %1535 = vmatprep.subr.bf16.mxu0 0
    %1536 = vmatpush1.bf16.msra.mxu0 %v1508
    %1537 = vmatprep.subr.bf16.mxu0 0
    %1538 = vmatpush1.bf16.msra.mxu0 %v1507
    %1539 = vmatprep.subr.bf16.mxu0 0
    %1540 = vmatpush2.bf16.msra.mxu0 0
    %1541 = vmatprep.subr.bf16.mxu0 0
    %1542 = vmatpush2.bf16.msra.mxu0 0
    %1543 = vmatprep.subr.bf16.mxu0 0
    %1544 = vmatpush2.bf16.msra.mxu0 0
    %1545 = vmatprep.subr.bf16.mxu0 0
    %1546 = vmatpush2.bf16.msra.mxu0 0
    %1547 = vmatprep.subr.bf16.mxu0 0
    %1548 = vmatpush2.bf16.msra.mxu0 0
    %1549 = vmatprep.subr.bf16.mxu0 0
    %1550 = vmatpush2.bf16.msra.mxu0 0
    %1551 = vmatprep.subr.bf16.mxu0 0
    %1552 = vmatpush2.bf16.msra.mxu0 0
    %1553 = vmatprep.subr.bf16.mxu0 0
    %1554 = vmatpush2.bf16.msra.mxu0 0
    %1555 = vmatprep.mubr.bf16.mxu0 0
    %1556 = vmatmul.mubr.bf16.gmra.mxu0 %v1474
    %v1557 = vpop.f32.mrf.mxu0
    %v1558 = vadd.f32 0.0, %v1557
    %v1559 = vpop.f32.mrf.mxu0
    %v1560 = vpop.f32.mrf.mxu0
    %v1561 = vpop.f32.mrf.mxu0
    %1562 = vdwg.mxu0
    %v1563 = vpack.c.bf16 %v1473, %v1473
    %v1580 = vunpack.c.l.b16 %v155
    %v1581 = vunpack.c.l.b16 %v156
    %v1582 = vunpack.c.l.b16 %v157
    %v1583 = vunpack.c.l.b16 %v158
    %v1584 = vunpack.c.l.b16 %v159
    %v1585 = vunpack.c.l.b16 %v160
    %v1586 = vunpack.c.l.b16 %v161
    %v1587 = vunpack.c.l.b16 %v162
    %v1588 = vunpack.c.l.b16 %v163
    %v1589 = vunpack.c.l.b16 %v164
    %v1590 = vunpack.c.l.b16 %v165
    %v1591 = vunpack.c.l.b16 %v166
    %v1592 = vunpack.c.l.b16 %v167
    %v1593 = vunpack.c.l.b16 %v168
    %v1594 = vunpack.c.l.b16 %v169
    %v1595 = vunpack.c.l.b16 %v170
    %v1596 = vpack.c.b16 %v1581, %v1580
    %v1597 = vpack.c.b16 %v1583, %v1582
    %v1598 = vpack.c.b16 %v1585, %v1584
    %v1599 = vpack.c.b16 %v1587, %v1586
    %v1600 = vpack.c.b16 %v1589, %v1588
    %v1601 = vpack.c.b16 %v1591, %v1590
    %v1602 = vpack.c.b16 %v1593, %v1592
    %v1603 = vpack.c.b16 %v1595, %v1594
    %1612 = vmatprep.subr.bf16.mxu0 0
    %1613 = vmatpush1.bf16.msra.mxu0 %v1603
    %1614 = vmatprep.subr.bf16.mxu0 0
    %1615 = vmatpush1.bf16.msra.mxu0 %v1602
    %1616 = vmatprep.subr.bf16.mxu0 0
    %1617 = vmatpush1.bf16.msra.mxu0 %v1601
    %1618 = vmatprep.subr.bf16.mxu0 0
    %1619 = vmatpush1.bf16.msra.mxu0 %v1600
    %1620 = vmatprep.subr.bf16.mxu0 0
    %1621 = vmatpush1.bf16.msra.mxu0 %v1599
    %1622 = vmatprep.subr.bf16.mxu0 0
    %1623 = vmatpush1.bf16.msra.mxu0 %v1598
    %1624 = vmatprep.subr.bf16.mxu0 0
    %1625 = vmatpush1.bf16.msra.mxu0 %v1597
    %1626 = vmatprep.subr.bf16.mxu0 0
    %1627 = vmatpush1.bf16.msra.mxu0 %v1596
    %1628 = vmatprep.subr.bf16.mxu0 0
    %1629 = vmatpush2.bf16.msra.mxu0 0
    %1630 = vmatprep.subr.bf16.mxu0 0
    %1631 = vmatpush2.bf16.msra.mxu0 0
    %1632 = vmatprep.subr.bf16.mxu0 0
    %1633 = vmatpush2.bf16.msra.mxu0 0
    %1634 = vmatprep.subr.bf16.mxu0 0
    %1635 = vmatpush2.bf16.msra.mxu0 0
    %1636 = vmatprep.subr.bf16.mxu0 0
    %1637 = vmatpush2.bf16.msra.mxu0 0
    %1638 = vmatprep.subr.bf16.mxu0 0
    %1639 = vmatpush2.bf16.msra.mxu0 0
    %1640 = vmatprep.subr.bf16.mxu0 0
    %1641 = vmatpush2.bf16.msra.mxu0 0
    %1642 = vmatprep.subr.bf16.mxu0 0
    %1643 = vmatpush2.bf16.msra.mxu0 0
    %1644 = vmatprep.mubr.bf16.mxu0 0
    %1645 = vmatmul.mubr.bf16.gmra.mxu0 %v1563
    %v1646 = vpop.f32.mrf.mxu0
    %v1647 = vadd.f32 0.0, %v1646
    %v1648 = vpop.f32.mrf.mxu0
    %v1649 = vpop.f32.mrf.mxu0
    %v1650 = vpop.f32.mrf.mxu0
    %1651 = vdwg.mxu0
    %v1652 = vlaneseq
    %v1653 = vshrl.u32 %v1652, 7
    %v1654 = vsub.s32 0, %v1653
    %v1655 = vrot.slane %v1558, %v1654
    %v1656 = vadd.f32 %v1655, %v1647
    %v1657 = vlaneseq
    %v1658 = vshrl.u32 %v1657, 7
    %v1659 = vsub.s32 0, %v1658
    %v1660 = vrot.slane %v69, %v1659
    %v1661 = vadd.f32 %v1656, %v1660
    %v1662 = vmul.f32 %v1661, 0.5
    %v1663 = vmul.f32 %v1661, 0.044715
    %v1664 = vmul.f32 %v1663, %v1661
    %v1665 = vmul.f32 %v1664, %v1661
    %v1666 = vadd.f32 %v1661, %v1665
    %v1667 = vmul.f32 %v1666, 0.7978846
    %v1668 = vtanh.pop %v1667
    %v1669 = vadd.f32 %v1668, 1.0
    %v1670 = vmul.f32 %v1662, %v1669
    %v1671 = vpack.c.bf16 %v1670, %v1670
    %v1672 = vlaneseq
    %v1673 = vshrl.u32 %v1672, 7
    %v1674 = vsub.s32 0, %v1673
    %v1675 = vrot.slane %v70, %v1674
    %v1692 = vunpack.c.l.b16 %v171
    %v1693 = vunpack.c.l.b16 %v172
    %v1694 = vunpack.c.l.b16 %v173
    %v1695 = vunpack.c.l.b16 %v174
    %v1696 = vunpack.c.l.b16 %v175
    %v1697 = vunpack.c.l.b16 %v176
    %v1698 = vunpack.c.l.b16 %v177
    %v1699 = vunpack.c.l.b16 %v178
    %v1700 = vunpack.c.l.b16 %v179
    %v1701 = vunpack.c.l.b16 %v180
    %v1702 = vunpack.c.l.b16 %v181
    %v1703 = vunpack.c.l.b16 %v182
    %v1704 = vunpack.c.l.b16 %v183
    %v1705 = vunpack.c.l.b16 %v184
    %v1706 = vunpack.c.l.b16 %v185
    %v1707 = vunpack.c.l.b16 %v186
    %v1708 = vpack.c.b16 %v1693, %v1692
    %v1709 = vpack.c.b16 %v1695, %v1694
    %v1710 = vpack.c.b16 %v1697, %v1696
    %v1711 = vpack.c.b16 %v1699, %v1698
    %v1712 = vpack.c.b16 %v1701, %v1700
    %v1713 = vpack.c.b16 %v1703, %v1702
    %v1714 = vpack.c.b16 %v1705, %v1704
    %v1715 = vpack.c.b16 %v1707, %v1706
    %1724 = vmatprep.subr.bf16.mxu0 0
    %1725 = vmatpush1.bf16.msra.mxu0 %v1715
    %1726 = vmatprep.subr.bf16.mxu0 0
    %1727 = vmatpush1.bf16.msra.mxu0 %v1714
    %1728 = vmatprep.subr.bf16.mxu0 0
    %1729 = vmatpush1.bf16.msra.mxu0 %v1713
    %1730 = vmatprep.subr.bf16.mxu0 0
    %1731 = vmatpush1.bf16.msra.mxu0 %v1712
    %1732 = vmatprep.subr.bf16.mxu0 0
    %1733 = vmatpush1.bf16.msra.mxu0 %v1711
    %1734 = vmatprep.subr.bf16.mxu0 0
    %1735 = vmatpush1.bf16.msra.mxu0 %v1710
    %1736 = vmatprep.subr.bf16.mxu0 0
    %1737 = vmatpush1.bf16.msra.mxu0 %v1709
    %1738 = vmatprep.subr.bf16.mxu0 0
    %1739 = vmatpush1.bf16.msra.mxu0 %v1708
    %1740 = vmatprep.subr.bf16.mxu0 0
    %1741 = vmatpush2.bf16.msra.mxu0 0
    %1742 = vmatprep.subr.bf16.mxu0 0
    %1743 = vmatpush2.bf16.msra.mxu0 0
    %1744 = vmatprep.subr.bf16.mxu0 0
    %1745 = vmatpush2.bf16.msra.mxu0 0
    %1746 = vmatprep.subr.bf16.mxu0 0
    %1747 = vmatpush2.bf16.msra.mxu0 0
    %1748 = vmatprep.subr.bf16.mxu0 0
    %1749 = vmatpush2.bf16.msra.mxu0 0
    %1750 = vmatprep.subr.bf16.mxu0 0
    %1751 = vmatpush2.bf16.msra.mxu0 0
    %1752 = vmatprep.subr.bf16.mxu0 0
    %1753 = vmatpush2.bf16.msra.mxu0 0
    %1754 = vmatprep.subr.bf16.mxu0 0
    %1755 = vmatpush2.bf16.msra.mxu0 0
    %1756 = vmatprep.mubr.bf16.mxu0 0
    %1757 = vmatmul.mubr.bf16.gmra.mxu0 %v1671
    %v1758 = vpop.f32.mrf.mxu0
    %v1759 = vadd.f32 %v1675, %v1758
    %v1760 = vpop.f32.mrf.mxu0
    %v1761 = vpop.f32.mrf.mxu0
    %v1762 = vpop.f32.mrf.mxu0
    %1763 = vdwg.mxu0
    %v1764 = vmul.f32 %v1759, 0.5
    %v1765 = vmul.f32 %v1759, 0.044715
    %v1766 = vmul.f32 %v1765, %v1759
    %v1767 = vmul.f32 %v1766, %v1759
    %v1768 = vadd.f32 %v1759, %v1767
    %v1769 = vmul.f32 %v1768, 0.7978846
    %v1770 = vtanh.pop %v1769
    %v1771 = vadd.f32 %v1770, 1.0
    %v1772 = vmul.f32 %v1764, %v1771
    %v1773 = vpack.c.bf16 %v1772, %v1772
    %v1774 = vlaneseq
    %v1775 = vshrl.u32 %v1774, 7
    %v1776 = vsub.s32 0, %v1775
    %v1777 = vrot.slane %v71, %v1776
    %v1794 = vunpack.c.l.b16 %v187
    %v1795 = vunpack.c.l.b16 %v188
    %v1796 = vunpack.c.l.b16 %v189
    %v1797 = vunpack.c.l.b16 %v190
    %v1798 = vunpack.c.l.b16 %v191
    %v1799 = vunpack.c.l.b16 %v192
    %v1800 = vunpack.c.l.b16 %v193
    %v1801 = vunpack.c.l.b16 %v194
    %v1802 = vunpack.c.l.b16 %v195
    %v1803 = vunpack.c.l.b16 %v196
    %v1804 = vunpack.c.l.b16 %v197
    %v1805 = vunpack.c.l.b16 %v198
    %v1806 = vunpack.c.l.b16 %v199
    %v1807 = vunpack.c.l.b16 %v200
    %v1808 = vunpack.c.l.b16 %v201
    %v1809 = vunpack.c.l.b16 %v202
    %v1810 = vpack.c.b16 %v1795, %v1794
    %v1811 = vpack.c.b16 %v1797, %v1796
    %v1812 = vpack.c.b16 %v1799, %v1798
    %v1813 = vpack.c.b16 %v1801, %v1800
    %v1814 = vpack.c.b16 %v1803, %v1802
    %v1815 = vpack.c.b16 %v1805, %v1804
    %v1816 = vpack.c.b16 %v1807, %v1806
    %v1817 = vpack.c.b16 %v1809, %v1808
    %1826 = vmatprep.subr.bf16.mxu0 0
    %1827 = vmatpush1.bf16.msra.mxu0 %v1817
    %1828 = vmatprep.subr.bf16.mxu0 0
    %1829 = vmatpush1.bf16.msra.mxu0 %v1816
    %1830 = vmatprep.subr.bf16.mxu0 0
    %1831 = vmatpush1.bf16.msra.mxu0 %v1815
    %1832 = vmatprep.subr.bf16.mxu0 0
    %1833 = vmatpush1.bf16.msra.mxu0 %v1814
    %1834 = vmatprep.subr.bf16.mxu0 0
    %1835 = vmatpush1.bf16.msra.mxu0 %v1813
    %1836 = vmatprep.subr.bf16.mxu0 0
    %1837 = vmatpush1.bf16.msra.mxu0 %v1812
    %1838 = vmatprep.subr.bf16.mxu0 0
    %1839 = vmatpush1.bf16.msra.mxu0 %v1811
    %1840 = vmatprep.subr.bf16.mxu0 0
    %1841 = vmatpush1.bf16.msra.mxu0 %v1810
    %1842 = vmatprep.subr.bf16.mxu0 0
    %1843 = vmatpush2.bf16.msra.mxu0 0
    %1844 = vmatprep.subr.bf16.mxu0 0
    %1845 = vmatpush2.bf16.msra.mxu0 0
    %1846 = vmatprep.subr.bf16.mxu0 0
    %1847 = vmatpush2.bf16.msra.mxu0 0
    %1848 = vmatprep.subr.bf16.mxu0 0
    %1849 = vmatpush2.bf16.msra.mxu0 0
    %1850 = vmatprep.subr.bf16.mxu0 0
    %1851 = vmatpush2.bf16.msra.mxu0 0
    %1852 = vmatprep.subr.bf16.mxu0 0
    %1853 = vmatpush2.bf16.msra.mxu0 0
    %1854 = vmatprep.subr.bf16.mxu0 0
    %1855 = vmatpush2.bf16.msra.mxu0 0
    %1856 = vmatprep.subr.bf16.mxu0 0
    %1857 = vmatpush2.bf16.msra.mxu0 0
    %1858 = vmatprep.mubr.bf16.mxu0 0
    %1859 = vmatmul.mubr.bf16.gmra.mxu0 %v1773
    %v1860 = vpop.f32.mrf.mxu0
    %v1861 = vadd.f32 %v1777, %v1860
    %v1862 = vpop.f32.mrf.mxu0
    %v1863 = vpop.f32.mrf.mxu0
    %v1864 = vpop.f32.mrf.mxu0
    %1865 = vdwg.mxu0
    %1866 = vst [vmem:[%s7] sm:$0xff] %v1861
    // Predicated region
    $region38: #{transformer_mlp_forward.1} parent=1 // pred_check
      _
    $region39: #{transformer_mlp_forward.1} parent=1 // pred_check_branch
      %1868 = sbr.rel (0) target = $region41
    $region40: #{transformer_mlp_forward.1} parent=1 // pred_region
      _
    $region41: #{transformer_mlp_forward.1} parent=1 // pred_fallthru
      _
    // Predicated region
    $region42: #{transformer_mlp_forward.1} parent=1 // pred_check
      _
    $region43: #{transformer_mlp_forward.1} parent=1 // pred_check_branch
      %1870 = sbr.rel (0) target = $region45
    $region44: #{transformer_mlp_forward.1} parent=1 // pred_region
      _
    $region45: #{transformer_mlp_forward.1} parent=1 // pred_fallthru
      _
    %1871 = vsyncpa [#allocation4], 1
    %1872 = vsyncpa [#allocation6], 1

</llo_original>
